<compile_context>
chip_gen: v7x
topology: tpu7x:2x2x1
jax: 0.10.0
libtpu: 0.0.40
codegen_flags: <defaults>
</compile_context>

<pallas_src>
import jax
import jax.numpy as jnp
from jax.experimental import pallas as pl
from jax.experimental.pallas import tpu as pltpu


def _round_up(x: int, m: int) -> int:
    return (x + m - 1) // m * m


def protonet_kernel(x_ref, proto_ref, w_ref, b_ref, out_ref):
    w = w_ref[...]          # (D, H)  bf16 MXU operand (resident across steps)
    b = b_ref[...]          # (1, H)  f32

    # transform(prototypes) = ReLU(proto @ W + b); transpose once so the cross
    # matmul below is a plain (TN,H)@(H,P) MXU feed and ||tp||^2 comes out
    # lane-major without any further transpose.
    tp = jnp.dot(proto_ref[...], w, preferred_element_type=jnp.float32)
    tp = jnp.maximum(tp + b, 0.0)                        # (P, H) f32
    tp_t = tp.T                                          # (H, P) f32, one XLU transpose
    p_sq = jnp.sum(tp_t * tp_t, axis=0, keepdims=True)   # (1, P) f32, lane-major

    # transform(x tile) = ReLU(x @ W + b)
    tx = jnp.dot(x_ref[...], w, preferred_element_type=jnp.float32)
    tx = jnp.maximum(tx + b, 0.0)                        # (TN, H) f32
    x_sq = jnp.sum(tx * tx, axis=-1, keepdims=True)      # (TN, 1) f32

    # torch.cdist(tx, tp): ||a-b||^2 = ||a||^2 + ||b||^2 - 2 a.b, clamped at 0.
    # Cross term stays f32 so it cancels consistently with x_sq / p_sq.
    cross = jnp.dot(tx, tp_t, preferred_element_type=jnp.float32)  # (TN, P)
    d2 = x_sq + p_sq - 2.0 * cross
    out_ref[...] = jnp.sqrt(jnp.maximum(d2, 0.0))


def protonet_forward(x, prototypes, w, b, *, block_n: int = 128,
                     mxu_dtype=jnp.bfloat16):
    """ProtoNet forward pass.

    x: (N, D) queries; prototypes: (P, D); w: (D, H) (transpose of PyTorch's
    nn.Linear (H, D) weight); b: (H,).  Returns float32 dists of shape (N, P)
    with dists[n, p] = || relu(W x_n + b) - relu(W proto_p + b) ||_2.
    """
    N, D = x.shape
    P, d_p = prototypes.shape
    d_w, H = w.shape
    assert D == d_p == d_w and b.shape == (H,)

    # TPU-friendly padded shapes (padding is numerically exact; see header).
    d_pad = _round_up(D, 128)
    h_pad = _round_up(H, 128)
    p_pad = _round_up(P, 128)            # lane-dense output stores
    tn = min(block_n, _round_up(N, 8))   # x rows per grid step
    n_pad = _round_up(N, tn)

    xp = jnp.pad(x.astype(mxu_dtype), ((0, n_pad - N), (0, d_pad - D)))
    pp = jnp.pad(prototypes.astype(mxu_dtype), ((0, p_pad - P), (0, d_pad - D)))
    wp = jnp.pad(w.astype(mxu_dtype), ((0, d_pad - D), (0, h_pad - H)))
    bp = jnp.pad(b.astype(jnp.float32).reshape(1, H), ((0, 0), (0, h_pad - H)))

    dists = pl.pallas_call(
        protonet_kernel,
        out_shape=jax.ShapeDtypeStruct((n_pad, p_pad), jnp.float32),
        grid=(n_pad // tn,),
        in_specs=[
            pl.BlockSpec((tn, d_pad), lambda i: (i, 0)),     # x tile (pipelined)
            pl.BlockSpec((p_pad, d_pad), lambda i: (0, 0)),  # prototypes (resident, default VMEM)
            pl.BlockSpec((d_pad, h_pad), lambda i: (0, 0)),  # weight (resident)
            pl.BlockSpec((1, h_pad), lambda i: (0, 0)),      # bias (resident)
        ],
        out_specs=pl.BlockSpec((tn, p_pad), lambda i: (i, 0)),
        compiler_params=pltpu.CompilerParams(
            dimension_semantics=("parallel",),
            vmem_limit_bytes=32 * 1024 * 1024,
        ),
    )(xp, pp, wp, bp)

    # Padded prototype columns / query rows hold real (but meaningless)
    # distances to relu(b) — slice them off before any downstream argmin.
    return dists[:N, :P]


if __name__ == "__main__":
    # Shapes matching the module constants: input_size=300, hidden_size=256,
    # a 5-way episode (P=5 prototypes), with queries batched to 300 rows so
    # the kernel sees multiple 128-row grid tiles (exercises padding of
    # N 300->384, D 300->384 and P 5->128).
    N, P = 300, 5
    D, H = 300, 256

    key = jax.random.PRNGKey(0)
    kx, kp, kw, kb = jax.random.split(key, 4)
    x = jax.random.normal(kx, (N, D), dtype=jnp.float32)
    prototypes = jax.random.normal(kp, (P, D), dtype=jnp.float32)
    # nn.Linear-style init U(-1/sqrt(D), 1/sqrt(D)); weight stored as (D, H)
    # (transpose of PyTorch's (H, D) weight) so the kernel matmuls are plain.
    bound = 1.0 / jnp.sqrt(jnp.float32(D))
    w = jax.random.uniform(kw, (D, H), dtype=jnp.float32, minval=-bound, maxval=bound)
    b = jax.random.uniform(kb, (H,), dtype=jnp.float32, minval=-bound, maxval=bound)

    fwd = jax.jit(lambda x_, p_, w_, b_: protonet_forward(x_, p_, w_, b_, block_n=128))
    dists = jax.block_until_ready(fwd(x, prototypes, w, b))
    assert dists.shape == (N, P)

    # Reference 1: mirrors the kernel's numerics (bf16 MXU operands, f32
    # accumulate, f32 distance) but with exact pairwise differences — tight
    # check of the kernel's math (Gram identity, padding, tiling).
    xb, pb, wb = (a.astype(jnp.bfloat16) for a in (x, prototypes, w))
    tx = jnp.maximum(jnp.dot(xb, wb, preferred_element_type=jnp.float32) + b, 0.0)
    tp = jnp.maximum(jnp.dot(pb, wb, preferred_element_type=jnp.float32) + b, 0.0)
    ref_mirror = jnp.sqrt(jnp.sum((tx[:, None, :] - tp[None, :, :]) ** 2, axis=-1))
    assert jnp.allclose(dists, ref_mirror, atol=2e-3, rtol=2e-3), \
        "mismatch vs bf16-operand reference"

    # Reference 2: pure-f32 PyTorch-module semantics; looser tolerance only to
    # absorb the bf16 cast of the Linear matmul operands.
    tx32 = jnp.maximum(x @ w + b, 0.0)
    tp32 = jnp.maximum(prototypes @ w + b, 0.0)
    ref_f32 = jnp.sqrt(jnp.sum((tx32[:, None, :] - tp32[None, :, :]) ** 2, axis=-1))
    assert jnp.allclose(dists, ref_f32, atol=2e-2, rtol=2e-2), \
        "mismatch vs f32 reference"

    print("KERNEL_OK")
</pallas_src>

<mosaic_0001>
module attributes {stable_mosaic.version = 11 : i64} {
  func.func @protonet_kernel(%arg0: i32, %arg1: memref<128x384xbf16, #tpu.memory_space<vmem>>, %arg2: memref<128x384xbf16, #tpu.memory_space<vmem>>, %arg3: memref<384x256xbf16, #tpu.memory_space<vmem>>, %arg4: memref<1x256xf32, #tpu.memory_space<vmem>>, %arg5: memref<128x128xf32, #tpu.memory_space<vmem>>) attributes {dimension_semantics = [#tpu.dimension_semantics<parallel>], iteration_bounds = array<i64: 3>, scalar_prefetch = 0 : i64, scratch_operands = 0 : i64, tpu.core_type = #tpu.core_type<tc>, window_params = [{transform_indices = @transform_0, window_bounds = array<i64: 128, 384>}, {pipeline_mode = #tpu.pipeline_mode<synchronous>, transform_indices = @transform_1, window_bounds = array<i64: 128, 384>}, {pipeline_mode = #tpu.pipeline_mode<synchronous>, transform_indices = @transform_2, window_bounds = array<i64: 384, 256>}, {pipeline_mode = #tpu.pipeline_mode<synchronous>, transform_indices = @transform_3, window_bounds = array<i64: 1, 256>}, {transform_indices = @transform_4, window_bounds = array<i64: 128, 128>}]} {
    %c0 = arith.constant 0 : index
    %c0_0 = arith.constant 0 : index
    %0 = vector.load %arg3[%c0, %c0_0] : memref<384x256xbf16, #tpu.memory_space<vmem>>, vector<384x256xbf16>
    %c0_1 = arith.constant 0 : index
    %c0_2 = arith.constant 0 : index
    %1 = vector.load %arg4[%c0_1, %c0_2] : memref<1x256xf32, #tpu.memory_space<vmem>>, vector<1x256xf32>
    %c0_3 = arith.constant 0 : index
    %c0_4 = arith.constant 0 : index
    %2 = vector.load %arg2[%c0_3, %c0_4] : memref<128x384xbf16, #tpu.memory_space<vmem>>, vector<128x384xbf16>
    %cst = arith.constant dense<0.000000e+00> : vector<128x256xf32>
    %3 = tpu.matmul %2, %0, %cst {dimension_numbers = #tpu.dot_dimension_numbers<[1], [0], [0], [1], [0, 0, 1, 1], [], []>} : vector<128x384xbf16>, vector<384x256xbf16>, vector<128x256xf32> -> vector<128x256xf32>
    %4 = vector.broadcast %1 : vector<1x256xf32> to vector<128x256xf32>
    %5 = arith.addf %3, %4 : vector<128x256xf32>
    %cst_5 = arith.constant 0.000000e+00 : f32
    %6 = vector.broadcast %cst_5 : f32 to vector<128x256xf32>
    %7 = arith.maximumf %5, %6 : vector<128x256xf32>
    %8 = tpu.transpose %7, [1, 0] : vector<128x256xf32> -> vector<256x128xf32>
    %9 = arith.mulf %8, %8 : vector<256x128xf32>
    %cst_6 = arith.constant dense<0.000000e+00> : vector<128xf32>
    %10 = vector.multi_reduction <add>, %9, %cst_6 [0] : vector<256x128xf32> to vector<128xf32>
    %11 = vector.shape_cast %10 : vector<128xf32> to vector<1x128xf32>
    %c0_7 = arith.constant 0 : index
    %c0_8 = arith.constant 0 : index
    %12 = vector.load %arg1[%c0_7, %c0_8] : memref<128x384xbf16, #tpu.memory_space<vmem>>, vector<128x384xbf16>
    %cst_9 = arith.constant dense<0.000000e+00> : vector<128x256xf32>
    %13 = tpu.matmul %12, %0, %cst_9 {dimension_numbers = #tpu.dot_dimension_numbers<[1], [0], [0], [1], [0, 0, 1, 1], [], []>} : vector<128x384xbf16>, vector<384x256xbf16>, vector<128x256xf32> -> vector<128x256xf32>
    %14 = vector.broadcast %1 : vector<1x256xf32> to vector<128x256xf32>
    %15 = arith.addf %13, %14 : vector<128x256xf32>
    %cst_10 = arith.constant 0.000000e+00 : f32
    %16 = vector.broadcast %cst_10 : f32 to vector<128x256xf32>
    %17 = arith.maximumf %15, %16 : vector<128x256xf32>
    %18 = arith.mulf %17, %17 : vector<128x256xf32>
    %cst_11 = arith.constant dense<0.000000e+00> : vector<128xf32>
    %19 = vector.multi_reduction <add>, %18, %cst_11 [1] : vector<128x256xf32> to vector<128xf32>
    %20 = vector.shape_cast %19 : vector<128xf32> to vector<128x1xf32>
    %cst_12 = arith.constant dense<0.000000e+00> : vector<128x128xf32>
    %21 = tpu.matmul %17, %8, %cst_12 {dimension_numbers = #tpu.dot_dimension_numbers<[1], [0], [0], [1], [0, 0, 1, 1], [], []>} : vector<128x256xf32>, vector<256x128xf32>, vector<128x128xf32> -> vector<128x128xf32>
    %22 = vector.broadcast %20 : vector<128x1xf32> to vector<128x128xf32>
    %23 = vector.broadcast %11 : vector<1x128xf32> to vector<128x128xf32>
    %24 = arith.addf %22, %23 : vector<128x128xf32>
    %cst_13 = arith.constant 2.000000e+00 : f32
    %25 = vector.broadcast %cst_13 : f32 to vector<128x128xf32>
    %26 = arith.mulf %25, %21 : vector<128x128xf32>
    %27 = arith.subf %24, %26 : vector<128x128xf32>
    %cst_14 = arith.constant 0.000000e+00 : f32
    %28 = vector.broadcast %cst_14 : f32 to vector<128x128xf32>
    %29 = arith.maximumf %27, %28 : vector<128x128xf32>
    %30 = math.sqrt %29 : vector<128x128xf32>
    %c0_15 = arith.constant 0 : index
    %c0_16 = arith.constant 0 : index
    %31 = vector.load %arg5[%c0_15, %c0_16] : memref<128x128xf32, #tpu.memory_space<vmem>>, vector<128x128xf32>
    tpu.vector_store %arg5[%c0_15, %c0_16], %30 {strides = array<i32>} : memref<128x128xf32, #tpu.memory_space<vmem>>, vector<128x128xf32>,
    return
  }
  func.func @transform_0(%arg0: i32) -> (i32, i32) {
    %c0_i32 = arith.constant 0 : i32
    %c0_i32_0 = arith.constant 0 : i32
    return %arg0, %c0_i32 : i32, i32
  }
  func.func @transform_1(%arg0: i32) -> (i32, i32) {
    %c0_i32 = arith.constant 0 : i32
    %c0_i32_0 = arith.constant 0 : i32
    %c0_i32_1 = arith.constant 0 : i32
    return %c0_i32, %c0_i32_0 : i32, i32
  }
  func.func @transform_2(%arg0: i32) -> (i32, i32) {
    %c0_i32 = arith.constant 0 : i32
    %c0_i32_0 = arith.constant 0 : i32
    %c0_i32_1 = arith.constant 0 : i32
    return %c0_i32, %c0_i32_0 : i32, i32
  }
  func.func @transform_3(%arg0: i32) -> (i32, i32) {
    %c0_i32 = arith.constant 0 : i32
    %c0_i32_0 = arith.constant 0 : i32
    %c0_i32_1 = arith.constant 0 : i32
    return %c0_i32, %c0_i32_0 : i32, i32
  }
  func.func @transform_4(%arg0: i32) -> (i32, i32) {
    %c0_i32 = arith.constant 0 : i32
    %c0_i32_0 = arith.constant 0 : i32
    return %arg0, %c0_i32 : i32, i32
  }
}

</mosaic_0001>

<llo_original>
// kernel: _lambda_.1
$region0: #{_lambda_.1}
  #allocation0 [shape = 'u32[]', space=smem, size = 0x4, offset = 0x4, fixed_abs, tag = 'smem constant byte address 0x4 - core index']
  #allocation1 [shape = 'u32[144,128]{1,0:T(1,128)}', space=vmem, size = 0x12000, scoped, tag = 'internal scratch']
  %s0 = inlined_call_operand.vmem [shape: bf16[384,384], index: 0, kind: input, shape index: {}]
  %s1 = inlined_call_operand.vmem [shape: bf16[128,384], index: 1, kind: input, shape index: {}]
  %s2 = inlined_call_operand.vmem [shape: bf16[384,256], index: 2, kind: input, shape index: {}]
  %s3 = inlined_call_operand.vmem [shape: f32[1,256], index: 3, kind: input, shape index: {}]
  %s4 = inlined_call_operand.vmem [shape: f32[384,128], index: 4, kind: output, shape index: {}]
  %s5 = sld [smem:[#allocation0]]
  $region49: #{_lambda_.1} parent=0
    _
  %s7 = ssub.s32 1, %s5
  %s8 = scalar_select 0, %s7, %s5
  loop: start=0, step=1, limit=5
  $region2: #{_lambda_.1} parent=0 // loop_pre_header
    _
  $region3: #{_lambda_.1} parent=0 // loop_header
    %s10 = sphi 0, %s14
    %p11 = scmp.ge.s32.totalorder %s10, 5
    %s20 = sphi 0, %s22
    %s23 = sphi 0, %s20
    %s24 = sphi 0, %s23
    %s40 = sphi 0, %s24
    %s44 = sphi 0, %s44
    %s46 = sphi 0, %s44
    %s47 = sphi 0, %s46
    %s61 = sphi 0, %s47
    %s65 = sphi 0, %s65
    %s67 = sphi 0, %s65
    %s68 = sphi 0, %s67
    %s82 = sphi 0, %s68
    %s86 = sphi 0, %s86
    %s88 = sphi 0, %s86
    %s89 = sphi 0, %s88
    %s103 = sphi 0, %s89
    %s109 = sphi 0, %s111
    %s112 = sphi 0, %s109
    %s113 = sphi 0, %s112
    %s129 = sphi 0, %s113
  $region4: #{_lambda_.1} parent=0 // loop_header_branch
    %13 = sbr.rel (%p11) target = $region8
  $region5: #{_lambda_.1} parent=0 // loop_body
    %s15 = ssub.s32 %s10, 1
    %s16 = ssub.s32 %s10, 2
    %s17 = sadd.s32 %s10, 1
    %s18 = ssub.s32 %s10, %s17
    %p19 = scmp.eq.s32.totalorder %s18, 0
    %s21 = sadd.s32 %s20, 1
    %s22 = scalar_select %p19, %s20, %s21
    %p25 = pneg %p19
    %p26 = scmp.eq.s32.totalorder %s10, 2
    %p27 = por %p25, %p26
    %p28 = scmp.ne.s32.totalorder %s20, %s23
    %p29 = scmp.eq.s32.totalorder %s10, 0
    %p30 = por %p28, %p29
    %p31 = scmp.ne.s32.totalorder %s20, %s23
    %p32 = scmp.eq.s32.totalorder %s15, 2
    %p33 = por %p31, %p32
    %p34 = scmp.ne.s32.totalorder %s23, %s24
    %p35 = scmp.eq.s32.totalorder %s15, 0
    %p36 = por %p34, %p35
    %p37 = scmp.ne.s32.totalorder %s23, %s24
    %p38 = scmp.eq.s32.totalorder %s16, 2
    %p39 = por %p37, %p38
    %p41 = scmp.ne.s32.totalorder %s24, %s40
    %p42 = scmp.eq.s32.totalorder %s16, 0
    %p43 = por %p41, %p42
    %s45 = sadd.s32 %s44, 1
    %p48 = scmp.eq.s32.totalorder %s10, 2
    %p49 = scmp.ne.s32.totalorder %s44, %s46
    %p50 = scmp.eq.s32.totalorder %s10, 0
    %p51 = por %p49, %p50
    %p52 = scmp.ne.s32.totalorder %s44, %s46
    %p53 = scmp.eq.s32.totalorder %s15, 2
    %p54 = por %p52, %p53
    %p55 = scmp.ne.s32.totalorder %s46, %s47
    %p56 = scmp.eq.s32.totalorder %s15, 0
    %p57 = por %p55, %p56
    %p58 = scmp.ne.s32.totalorder %s46, %s47
    %p59 = scmp.eq.s32.totalorder %s16, 2
    %p60 = por %p58, %p59
    %p62 = scmp.ne.s32.totalorder %s47, %s61
    %p63 = scmp.eq.s32.totalorder %s16, 0
    %p64 = por %p62, %p63
    %s66 = sadd.s32 %s65, 1
    %p69 = scmp.eq.s32.totalorder %s10, 2
    %p70 = scmp.ne.s32.totalorder %s65, %s67
    %p71 = scmp.eq.s32.totalorder %s10, 0
    %p72 = por %p70, %p71
    %p73 = scmp.ne.s32.totalorder %s65, %s67
    %p74 = scmp.eq.s32.totalorder %s15, 2
    %p75 = por %p73, %p74
    %p76 = scmp.ne.s32.totalorder %s67, %s68
    %p77 = scmp.eq.s32.totalorder %s15, 0
    %p78 = por %p76, %p77
    %p79 = scmp.ne.s32.totalorder %s67, %s68
    %p80 = scmp.eq.s32.totalorder %s16, 2
    %p81 = por %p79, %p80
    %p83 = scmp.ne.s32.totalorder %s68, %s82
    %p84 = scmp.eq.s32.totalorder %s16, 0
    %p85 = por %p83, %p84
    %s87 = sadd.s32 %s86, 1
    %p90 = scmp.eq.s32.totalorder %s10, 2
    %p91 = scmp.ne.s32.totalorder %s86, %s88
    %p92 = scmp.eq.s32.totalorder %s10, 0
    %p93 = por %p91, %p92
    %p94 = scmp.ne.s32.totalorder %s86, %s88
    %p95 = scmp.eq.s32.totalorder %s15, 2
    %p96 = por %p94, %p95
    %p97 = scmp.ne.s32.totalorder %s88, %s89
    %p98 = scmp.eq.s32.totalorder %s15, 0
    %p99 = por %p97, %p98
    %p100 = scmp.ne.s32.totalorder %s88, %s89
    %p101 = scmp.eq.s32.totalorder %s16, 2
    %p102 = por %p100, %p101
    %p104 = scmp.ne.s32.totalorder %s89, %s103
    %p105 = scmp.eq.s32.totalorder %s16, 0
    %p106 = por %p104, %p105
    %s107 = ssub.s32 %s10, %s17
    %p108 = scmp.eq.s32.totalorder %s107, 0
    %s110 = sadd.s32 %s109, 1
    %s111 = scalar_select %p108, %s109, %s110
    %p114 = pneg %p108
    %p115 = scmp.eq.s32.totalorder %s10, 2
    %p116 = por %p114, %p115
    %p117 = scmp.ne.s32.totalorder %s109, %s112
    %p118 = scmp.eq.s32.totalorder %s10, 0
    %p119 = por %p117, %p118
    %p120 = scmp.ne.s32.totalorder %s109, %s112
    %p121 = scmp.eq.s32.totalorder %s15, 2
    %p122 = por %p120, %p121
    %p123 = scmp.ne.s32.totalorder %s112, %s113
    %p124 = scmp.eq.s32.totalorder %s15, 0
    %p125 = por %p123, %p124
    %p126 = scmp.ne.s32.totalorder %s112, %s113
    %p127 = scmp.eq.s32.totalorder %s16, 2
    %p128 = por %p126, %p127
    %p130 = scmp.ne.s32.totalorder %s113, %s129
    %p131 = scmp.eq.s32.totalorder %s16, 0
    %p132 = por %p130, %p131
    %p133 = scmp.le.s32.totalorder 1, %s10
    %p134 = scmp.lt.s32.totalorder %s10, 4
    %p135 = pnand %p133, %p134
    %p136 = pneg %p135
    // Predicated region
    $region9: #{_lambda_.1} parent=5 // pred_check
      _
    $region10: #{_lambda_.1} parent=5 // pred_check_branch
      %138 = sbr.rel (%p135) target = $region12
    $region11: #{_lambda_.1} parent=5 // pred_region
      %s139 = ssub.s32 %s10, 1
      // Predicated region
      $region13: #{_lambda_.1} parent=11 // pred_check
        %p140 = pneg %p57
      $region14: #{_lambda_.1} parent=11 // pred_check_branch
        %142 = sbr.rel (%p140) target = $region16
      $region15: #{_lambda_.1} parent=11 // pred_region
        _
      $region16: #{_lambda_.1} parent=11 // pred_fallthru
        _
      // Predicated region
      $region17: #{_lambda_.1} parent=11 // pred_check
        %p143 = pneg %p78
      $region18: #{_lambda_.1} parent=11 // pred_check_branch
        %145 = sbr.rel (%p143) target = $region20
      $region19: #{_lambda_.1} parent=11 // pred_region
        _
      $region20: #{_lambda_.1} parent=11 // pred_fallthru
        _
      // Predicated region
      $region21: #{_lambda_.1} parent=11 // pred_check
        %p146 = pneg %p99
      $region22: #{_lambda_.1} parent=11 // pred_check_branch
        %148 = sbr.rel (%p146) target = $region24
      $region23: #{_lambda_.1} parent=11 // pred_region
        _
      $region24: #{_lambda_.1} parent=11 // pred_fallthru
        _
    $region12: #{_lambda_.1} parent=5 // pred_fallthru
      _
    %p149 = scmp.lt.s32.totalorder %s10, 3
    // Predicated region
    $region25: #{_lambda_.1} parent=5 // pred_check
      %p150 = pneg %p149
    $region26: #{_lambda_.1} parent=5 // pred_check_branch
      %152 = sbr.rel (%p150) target = $region28
    $region27: #{_lambda_.1} parent=5 // pred_region
      // Predicated region
      $region29: #{_lambda_.1} parent=27 // pred_check
        %p153 = pneg %p30
      $region30: #{_lambda_.1} parent=27 // pred_check_branch
        %155 = sbr.rel (%p153) target = $region32
      $region31: #{_lambda_.1} parent=27 // pred_region
        %s156 = smul.u32 16, %s10
        %p157 = scmp.lt.s32.totalorder %s156, 47
        %s158 = scalar_select %p157, %s156, 47
        %s159 = smul.addr %s158, 3
        %s160 = smul.addr %s159, 4
        %s161 = scalar_lea.vmem %s0, %s160
        %s162 = smul.u32 16, %s10
      $region32: #{_lambda_.1} parent=27 // pred_fallthru
        _
    $region28: #{_lambda_.1} parent=5 // pred_fallthru
      _
    %p163 = scmp.le.s32.totalorder 1, %s10
    %p164 = scmp.lt.s32.totalorder %s10, 4
    %p165 = pnand %p163, %p164
    %p166 = pneg %p165
    // Predicated region
    $region33: #{_lambda_.1} parent=5 // pred_check
      _
    $region34: #{_lambda_.1} parent=5 // pred_check_branch
      %168 = sbr.rel (%p165) target = $region36
    $region35: #{_lambda_.1} parent=5 // pred_region
      %s169 = ssub.s32 %s10, 1
      %s170 = smul.u32 16, %s15
      %p171 = scmp.lt.s32.totalorder %s170, 47
      %s172 = scalar_select %p171, %s170, 47
      %s173 = smul.addr %s172, 3
      %s174 = smul.addr %s173, 4
      %s175 = scalar_lea.vmem %s0, %s174
      %p176 = pneg %p36
      %p177 = pneg %p33
      %p178 = pneg %p57
      %p179 = pneg %p54
      %p180 = pneg %p78
      %p181 = pneg %p75
      %p182 = pneg %p99
      %p183 = pneg %p96
      %p184 = pneg %p125
      %p185 = pneg %p122
      %s186 = smul.u32 16, %s15
      %p187 = scmp.lt.s32.totalorder %s186, 47
      %s188 = scalar_select %p187, %s186, 47
      %s189 = smul.addr %s188, 8
      %s190 = scalar_lea.vmem %s4, %s189
      %s191 = smul.u32 16, %s15
      %p192 = scmp.lt.s32.totalorder %s191, 47
      %s193 = scalar_select %p192, %s191, 47
      %s194 = smul.addr %s193, 3
      %s195 = smul.addr %s194, 4
      %s196 = scalar_lea.vmem %s0, %s195
      %s197 = smul.u32 16, %s15
      %s198 = smul.u32 16, %s15
      %p199 = scmp.lt.s32.totalorder %s198, 47
      %s200 = scalar_select %p199, %s198, 47
      %s201 = smul.addr %s200, 8
      %s202 = scalar_lea.vmem %s4, %s201
      %s203 = smul.u32 16, %s15
      %v205 = vld [vmem:[%s2] sm:$0xff]
      %v206 = vld [vmem:[%s2 + $0x8] sm:$0xff]
      %v207 = vld [vmem:[%s2 + $0x10] sm:$0xff]
      %v208 = vld [vmem:[%s2 + $0x18] sm:$0xff]
      %v209 = vld [vmem:[%s2 + $0x20] sm:$0xff]
      %v210 = vld [vmem:[%s2 + $0x28] sm:$0xff]
      %v211 = vld [vmem:[%s2 + $0x30] sm:$0xff]
      %v212 = vld [vmem:[%s2 + $0x38] sm:$0xff]
      %v213 = vld [vmem:[%s2 + $0x40] sm:$0xff]
      %v214 = vld [vmem:[%s2 + $0x48] sm:$0xff]
      %v215 = vld [vmem:[%s2 + $0x50] sm:$0xff]
      %v216 = vld [vmem:[%s2 + $0x58] sm:$0xff]
      %v217 = vld [vmem:[%s2 + $0x60] sm:$0xff]
      %v218 = vld [vmem:[%s2 + $0x68] sm:$0xff]
      %v219 = vld [vmem:[%s2 + $0x70] sm:$0xff]
      %v220 = vld [vmem:[%s2 + $0x78] sm:$0xff]
      %v221 = vld [vmem:[%s2 + $0x80] sm:$0xff]
      %v222 = vld [vmem:[%s2 + $0x88] sm:$0xff]
      %v223 = vld [vmem:[%s2 + $0x90] sm:$0xff]
      %v224 = vld [vmem:[%s2 + $0x98] sm:$0xff]
      %v225 = vld [vmem:[%s2 + $0xa0] sm:$0xff]
      %v226 = vld [vmem:[%s2 + $0xa8] sm:$0xff]
      %v227 = vld [vmem:[%s2 + $0xb0] sm:$0xff]
      %v228 = vld [vmem:[%s2 + $0xb8] sm:$0xff]
      %v229 = vld [vmem:[%s2 + $0xc0] sm:$0xff]
      %v230 = vld [vmem:[%s2 + $0xc8] sm:$0xff]
      %v231 = vld [vmem:[%s2 + $0xd0] sm:$0xff]
      %v232 = vld [vmem:[%s2 + $0xd8] sm:$0xff]
      %v233 = vld [vmem:[%s2 + $0xe0] sm:$0xff]
      %v234 = vld [vmem:[%s2 + $0xe8] sm:$0xff]
      %v235 = vld [vmem:[%s2 + $0xf0] sm:$0xff]
      %v236 = vld [vmem:[%s2 + $0xf8] sm:$0xff]
      %v237 = vld [vmem:[%s2 + $0x100] sm:$0xff]
      %v238 = vld [vmem:[%s2 + $0x108] sm:$0xff]
      %v239 = vld [vmem:[%s2 + $0x110] sm:$0xff]
      %v240 = vld [vmem:[%s2 + $0x118] sm:$0xff]
      %v241 = vld [vmem:[%s2 + $0x120] sm:$0xff]
      %v242 = vld [vmem:[%s2 + $0x128] sm:$0xff]
      %v243 = vld [vmem:[%s2 + $0x130] sm:$0xff]
      %v244 = vld [vmem:[%s2 + $0x138] sm:$0xff]
      %v245 = vld [vmem:[%s2 + $0x140] sm:$0xff]
      %v246 = vld [vmem:[%s2 + $0x148] sm:$0xff]
      %v247 = vld [vmem:[%s2 + $0x150] sm:$0xff]
      %v248 = vld [vmem:[%s2 + $0x158] sm:$0xff]
      %v249 = vld [vmem:[%s2 + $0x160] sm:$0xff]
      %v250 = vld [vmem:[%s2 + $0x168] sm:$0xff]
      %v251 = vld [vmem:[%s2 + $0x170] sm:$0xff]
      %v252 = vld [vmem:[%s2 + $0x178] sm:$0xff]
      %v253 = vld [vmem:[%s3] sm:$0x3]
      %v254 = vld [vmem:[%s1] sm:$0xff]
      %v255 = vld [vmem:[%s1 + $0x8] sm:$0xf]
      %v256 = vld [vmem:[%s1 + $0xc] sm:$0xff]
      %v257 = vld [vmem:[%s1 + $0x14] sm:$0xf]
      %v258 = vld [vmem:[%s1 + $0x18] sm:$0xff]
      %v259 = vld [vmem:[%s1 + $0x20] sm:$0xf]
      %v260 = vld [vmem:[%s1 + $0x24] sm:$0xff]
      %v261 = vld [vmem:[%s1 + $0x2c] sm:$0xf]
      %v262 = vld [vmem:[%s1 + $0x30] sm:$0xff]
      %v263 = vld [vmem:[%s1 + $0x38] sm:$0xf]
      %v264 = vld [vmem:[%s1 + $0x3c] sm:$0xff]
      %v265 = vld [vmem:[%s1 + $0x44] sm:$0xf]
      %v266 = vld [vmem:[%s1 + $0x48] sm:$0xff]
      %v267 = vld [vmem:[%s1 + $0x50] sm:$0xf]
      %v268 = vld [vmem:[%s1 + $0x54] sm:$0xff]
      %v269 = vld [vmem:[%s1 + $0x5c] sm:$0xf]
      %v270 = vld [vmem:[%s1 + $0x60] sm:$0xff]
      %v271 = vld [vmem:[%s1 + $0x68] sm:$0xf]
      %v272 = vld [vmem:[%s1 + $0x6c] sm:$0xff]
      %v273 = vld [vmem:[%s1 + $0x74] sm:$0xf]
      %v274 = vld [vmem:[%s1 + $0x78] sm:$0xff]
      %v275 = vld [vmem:[%s1 + $0x80] sm:$0xf]
      %v276 = vld [vmem:[%s1 + $0x84] sm:$0xff]
      %v277 = vld [vmem:[%s1 + $0x8c] sm:$0xf]
      %v278 = vld [vmem:[%s1 + $0x90] sm:$0xff]
      %v279 = vld [vmem:[%s1 + $0x98] sm:$0xf]
      %v280 = vld [vmem:[%s1 + $0x9c] sm:$0xff]
      %v281 = vld [vmem:[%s1 + $0xa4] sm:$0xf]
      %v282 = vld [vmem:[%s1 + $0xa8] sm:$0xff]
      %v283 = vld [vmem:[%s1 + $0xb0] sm:$0xf]
      %v284 = vld [vmem:[%s1 + $0xb4] sm:$0xff]
      %v285 = vld [vmem:[%s1 + $0xbc] sm:$0xf]
      %v287 = vlaneseq
      %v288 = vshrl.u32 %v287, 7
      %v289 = vsub.s32 0, %v288
      %v290 = vrot.slane %v253, %v289
      %v291 = vlaneseq
      %v292 = vshrl.u32 %v291, 7
      %v293 = vsub.s32 1, %v292
      %v294 = vrot.slane %v253, %v293
      %v329 = vunpack.c.l.b16 %v254
      %v330 = vunpack.c.h.b16 %v254
      %v331 = vunpack.c.l.b16 %v255
      %v332 = vunpack.c.l.b16 %v256
      %v333 = vunpack.c.h.b16 %v256
      %v334 = vunpack.c.l.b16 %v257
      %v335 = vunpack.c.l.b16 %v258
      %v336 = vunpack.c.h.b16 %v258
      %v337 = vunpack.c.l.b16 %v259
      %v338 = vunpack.c.l.b16 %v260
      %v339 = vunpack.c.h.b16 %v260
      %v340 = vunpack.c.l.b16 %v261
      %v341 = vunpack.c.l.b16 %v262
      %v342 = vunpack.c.h.b16 %v262
      %v343 = vunpack.c.l.b16 %v263
      %v344 = vunpack.c.l.b16 %v264
      %v345 = vunpack.c.h.b16 %v264
      %v346 = vunpack.c.l.b16 %v265
      %v347 = vunpack.c.l.b16 %v266
      %v348 = vunpack.c.h.b16 %v266
      %v349 = vunpack.c.l.b16 %v267
      %v350 = vunpack.c.l.b16 %v268
      %v351 = vunpack.c.h.b16 %v268
      %v352 = vunpack.c.l.b16 %v269
      %v353 = vunpack.c.l.b16 %v270
      %v354 = vunpack.c.h.b16 %v270
      %v355 = vunpack.c.l.b16 %v271
      %v356 = vunpack.c.l.b16 %v272
      %v357 = vunpack.c.h.b16 %v272
      %v358 = vunpack.c.l.b16 %v273
      %v359 = vunpack.c.l.b16 %v274
      %v360 = vunpack.c.h.b16 %v274
      %v361 = vunpack.c.l.b16 %v275
      %v362 = vunpack.c.l.b16 %v276
      %v363 = vunpack.c.h.b16 %v276
      %v364 = vunpack.c.l.b16 %v277
      %v365 = vunpack.c.l.b16 %v278
      %v366 = vunpack.c.h.b16 %v278
      %v367 = vunpack.c.l.b16 %v279
      %v368 = vunpack.c.l.b16 %v280
      %v369 = vunpack.c.h.b16 %v280
      %v370 = vunpack.c.l.b16 %v281
      %v371 = vunpack.c.l.b16 %v282
      %v372 = vunpack.c.h.b16 %v282
      %v373 = vunpack.c.l.b16 %v283
      %v374 = vunpack.c.l.b16 %v284
      %v375 = vunpack.c.h.b16 %v284
      %v376 = vunpack.c.l.b16 %v285
      %v377 = vpack.c.b16 %v332, %v329
      %v378 = vpack.c.b16 %v333, %v330
      %v379 = vpack.c.b16 %v334, %v331
      %v380 = vpack.c.b16 %v338, %v335
      %v381 = vpack.c.b16 %v339, %v336
      %v382 = vpack.c.b16 %v340, %v337
      %v383 = vpack.c.b16 %v344, %v341
      %v384 = vpack.c.b16 %v345, %v342
      %v385 = vpack.c.b16 %v346, %v343
      %v386 = vpack.c.b16 %v350, %v347
      %v387 = vpack.c.b16 %v351, %v348
      %v388 = vpack.c.b16 %v352, %v349
      %v389 = vpack.c.b16 %v356, %v353
      %v390 = vpack.c.b16 %v357, %v354
      %v391 = vpack.c.b16 %v358, %v355
      %v392 = vpack.c.b16 %v362, %v359
      %v393 = vpack.c.b16 %v363, %v360
      %v394 = vpack.c.b16 %v364, %v361
      %v395 = vpack.c.b16 %v368, %v365
      %v396 = vpack.c.b16 %v369, %v366
      %v397 = vpack.c.b16 %v370, %v367
      %v398 = vpack.c.b16 %v374, %v371
      %v399 = vpack.c.b16 %v375, %v372
      %v400 = vpack.c.b16 %v376, %v373
      %v473 = vunpack.c.l.b16 %v205
      %v474 = vunpack.c.h.b16 %v205
      %v475 = vunpack.c.l.b16 %v206
      %v476 = vunpack.c.h.b16 %v206
      %v477 = vunpack.c.l.b16 %v207
      %v478 = vunpack.c.h.b16 %v207
      %v479 = vunpack.c.l.b16 %v208
      %v480 = vunpack.c.h.b16 %v208
      %v481 = vunpack.c.l.b16 %v209
      %v482 = vunpack.c.h.b16 %v209
      %v483 = vunpack.c.l.b16 %v210
      %v484 = vunpack.c.h.b16 %v210
      %v485 = vunpack.c.l.b16 %v211
      %v486 = vunpack.c.h.b16 %v211
      %v487 = vunpack.c.l.b16 %v212
      %v488 = vunpack.c.h.b16 %v212
      %v489 = vunpack.c.l.b16 %v213
      %v490 = vunpack.c.h.b16 %v213
      %v491 = vunpack.c.l.b16 %v214
      %v492 = vunpack.c.h.b16 %v214
      %v493 = vunpack.c.l.b16 %v215
      %v494 = vunpack.c.h.b16 %v215
      %v495 = vunpack.c.l.b16 %v216
      %v496 = vunpack.c.h.b16 %v216
      %v497 = vunpack.c.l.b16 %v217
      %v498 = vunpack.c.h.b16 %v217
      %v499 = vunpack.c.l.b16 %v218
      %v500 = vunpack.c.h.b16 %v218
      %v501 = vunpack.c.l.b16 %v219
      %v502 = vunpack.c.h.b16 %v219
      %v503 = vunpack.c.l.b16 %v220
      %v504 = vunpack.c.h.b16 %v220
      %v505 = vunpack.c.l.b16 %v221
      %v506 = vunpack.c.h.b16 %v221
      %v507 = vunpack.c.l.b16 %v222
      %v508 = vunpack.c.h.b16 %v222
      %v509 = vunpack.c.l.b16 %v223
      %v510 = vunpack.c.h.b16 %v223
      %v511 = vunpack.c.l.b16 %v224
      %v512 = vunpack.c.h.b16 %v224
      %v513 = vunpack.c.l.b16 %v225
      %v514 = vunpack.c.h.b16 %v225
      %v515 = vunpack.c.l.b16 %v226
      %v516 = vunpack.c.h.b16 %v226
      %v517 = vunpack.c.l.b16 %v227
      %v518 = vunpack.c.h.b16 %v227
      %v519 = vunpack.c.l.b16 %v228
      %v520 = vunpack.c.h.b16 %v228
      %v521 = vunpack.c.l.b16 %v229
      %v522 = vunpack.c.h.b16 %v229
      %v523 = vunpack.c.l.b16 %v230
      %v524 = vunpack.c.h.b16 %v230
      %v525 = vunpack.c.l.b16 %v231
      %v526 = vunpack.c.h.b16 %v231
      %v527 = vunpack.c.l.b16 %v232
      %v528 = vunpack.c.h.b16 %v232
      %v529 = vunpack.c.l.b16 %v233
      %v530 = vunpack.c.h.b16 %v233
      %v531 = vunpack.c.l.b16 %v234
      %v532 = vunpack.c.h.b16 %v234
      %v533 = vunpack.c.l.b16 %v235
      %v534 = vunpack.c.h.b16 %v235
      %v535 = vunpack.c.l.b16 %v236
      %v536 = vunpack.c.h.b16 %v236
      %v537 = vunpack.c.l.b16 %v237
      %v538 = vunpack.c.h.b16 %v237
      %v539 = vunpack.c.l.b16 %v238
      %v540 = vunpack.c.h.b16 %v238
      %v541 = vunpack.c.l.b16 %v239
      %v542 = vunpack.c.h.b16 %v239
      %v543 = vunpack.c.l.b16 %v240
      %v544 = vunpack.c.h.b16 %v240
      %v545 = vunpack.c.l.b16 %v241
      %v546 = vunpack.c.h.b16 %v241
      %v547 = vunpack.c.l.b16 %v242
      %v548 = vunpack.c.h.b16 %v242
      %v549 = vunpack.c.l.b16 %v243
      %v550 = vunpack.c.h.b16 %v243
      %v551 = vunpack.c.l.b16 %v244
      %v552 = vunpack.c.h.b16 %v244
      %v553 = vunpack.c.l.b16 %v245
      %v554 = vunpack.c.h.b16 %v245
      %v555 = vunpack.c.l.b16 %v246
      %v556 = vunpack.c.h.b16 %v246
      %v557 = vunpack.c.l.b16 %v247
      %v558 = vunpack.c.h.b16 %v247
      %v559 = vunpack.c.l.b16 %v248
      %v560 = vunpack.c.h.b16 %v248
      %v561 = vunpack.c.l.b16 %v249
      %v562 = vunpack.c.h.b16 %v249
      %v563 = vunpack.c.l.b16 %v250
      %v564 = vunpack.c.h.b16 %v250
      %v565 = vunpack.c.l.b16 %v251
      %v566 = vunpack.c.h.b16 %v251
      %v567 = vunpack.c.l.b16 %v252
      %v568 = vunpack.c.h.b16 %v252
      %v569 = vpack.c.b16 %v475, %v473
      %v570 = vpack.c.b16 %v476, %v474
      %v571 = vpack.c.b16 %v479, %v477
      %v572 = vpack.c.b16 %v480, %v478
      %v573 = vpack.c.b16 %v483, %v481
      %v574 = vpack.c.b16 %v484, %v482
      %v575 = vpack.c.b16 %v487, %v485
      %v576 = vpack.c.b16 %v488, %v486
      %v577 = vpack.c.b16 %v491, %v489
      %v578 = vpack.c.b16 %v492, %v490
      %v579 = vpack.c.b16 %v495, %v493
      %v580 = vpack.c.b16 %v496, %v494
      %v581 = vpack.c.b16 %v499, %v497
      %v582 = vpack.c.b16 %v500, %v498
      %v583 = vpack.c.b16 %v503, %v501
      %v584 = vpack.c.b16 %v504, %v502
      %v585 = vpack.c.b16 %v507, %v505
      %v586 = vpack.c.b16 %v508, %v506
      %v587 = vpack.c.b16 %v511, %v509
      %v588 = vpack.c.b16 %v512, %v510
      %v589 = vpack.c.b16 %v515, %v513
      %v590 = vpack.c.b16 %v516, %v514
      %v591 = vpack.c.b16 %v519, %v517
      %v592 = vpack.c.b16 %v520, %v518
      %v593 = vpack.c.b16 %v523, %v521
      %v594 = vpack.c.b16 %v524, %v522
      %v595 = vpack.c.b16 %v527, %v525
      %v596 = vpack.c.b16 %v528, %v526
      %v597 = vpack.c.b16 %v531, %v529
      %v598 = vpack.c.b16 %v532, %v530
      %v599 = vpack.c.b16 %v535, %v533
      %v600 = vpack.c.b16 %v536, %v534
      %v601 = vpack.c.b16 %v539, %v537
      %v602 = vpack.c.b16 %v540, %v538
      %v603 = vpack.c.b16 %v543, %v541
      %v604 = vpack.c.b16 %v544, %v542
      %v605 = vpack.c.b16 %v547, %v545
      %v606 = vpack.c.b16 %v548, %v546
      %v607 = vpack.c.b16 %v551, %v549
      %v608 = vpack.c.b16 %v552, %v550
      %v609 = vpack.c.b16 %v555, %v553
      %v610 = vpack.c.b16 %v556, %v554
      %v611 = vpack.c.b16 %v559, %v557
      %v612 = vpack.c.b16 %v560, %v558
      %v613 = vpack.c.b16 %v563, %v561
      %v614 = vpack.c.b16 %v564, %v562
      %v615 = vpack.c.b16 %v567, %v565
      %v616 = vpack.c.b16 %v568, %v566
      %665 = vmatprep.subr.bf16.mxu0 %v570
      %666 = vmatpush1.bf16.msra.mxu0 %v569
      %667 = vmatprep.subr.bf16.mxu0 %v572
      %668 = vmatpush1.bf16.msra.mxu0 %v571
      %669 = vmatprep.subr.bf16.mxu0 %v574
      %670 = vmatpush1.bf16.msra.mxu0 %v573
      %671 = vmatprep.subr.bf16.mxu0 %v576
      %672 = vmatpush1.bf16.msra.mxu0 %v575
      %673 = vmatprep.subr.bf16.mxu0 %v578
      %674 = vmatpush1.bf16.msra.mxu0 %v577
      %675 = vmatprep.subr.bf16.mxu0 %v580
      %676 = vmatpush1.bf16.msra.mxu0 %v579
      %677 = vmatprep.subr.bf16.mxu0 %v582
      %678 = vmatpush1.bf16.msra.mxu0 %v581
      %679 = vmatprep.subr.bf16.mxu0 %v584
      %680 = vmatpush1.bf16.msra.mxu0 %v583
      %681 = vmatprep.subr.bf16.mxu0 %v586
      %682 = vmatpush1.bf16.msra.mxu0 %v585
      %683 = vmatprep.subr.bf16.mxu0 %v588
      %684 = vmatpush1.bf16.msra.mxu0 %v587
      %685 = vmatprep.subr.bf16.mxu0 %v590
      %686 = vmatpush1.bf16.msra.mxu0 %v589
      %687 = vmatprep.subr.bf16.mxu0 %v592
      %688 = vmatpush1.bf16.msra.mxu0 %v591
      %689 = vmatprep.subr.bf16.mxu0 %v594
      %690 = vmatpush1.bf16.msra.mxu0 %v593
      %691 = vmatprep.subr.bf16.mxu0 %v596
      %692 = vmatpush1.bf16.msra.mxu0 %v595
      %693 = vmatprep.subr.bf16.mxu0 %v598
      %694 = vmatpush1.bf16.msra.mxu0 %v597
      %695 = vmatprep.subr.bf16.mxu0 %v600
      %696 = vmatpush1.bf16.msra.mxu0 %v599
      %697 = vmatprep.mubr.bf16.mxu0 %v378
      %698 = vmatmul.mubr.bf16.gmra.mrb[0].mxu0 %v377
      %v699 = vpop.f32.mrb[0].mxu0
      %v700 = vadd.f32 %v290, %v699
      %v701 = vpop.f32.mrb[0].mxu0
      %v702 = vadd.f32 %v294, %v701
      %v703 = vpop.f32.mrb[0].mxu0
      %v704 = vadd.f32 %v290, %v703
      %v705 = vpop.f32.mrb[0].mxu0
      %v706 = vadd.f32 %v294, %v705
      %707 = vmatprep.mubr.bf16.mxu0 %v381
      %708 = vmatmul.mubr.bf16.gmra.mrb[0].mxu0 %v380
      %v709 = vpop.f32.mrb[0].mxu0
      %v710 = vadd.f32 %v290, %v709
      %v711 = vpop.f32.mrb[0].mxu0
      %v712 = vadd.f32 %v294, %v711
      %v713 = vpop.f32.mrb[0].mxu0
      %v714 = vadd.f32 %v290, %v713
      %v715 = vpop.f32.mrb[0].mxu0
      %v716 = vadd.f32 %v294, %v715
      %717 = vmatprep.mubr.bf16.mxu0 %v384
      %718 = vmatmul.mubr.bf16.gmra.mrb[0].mxu0 %v383
      %v719 = vpop.f32.mrb[0].mxu0
      %v720 = vadd.f32 %v290, %v719
      %v721 = vpop.f32.mrb[0].mxu0
      %v722 = vadd.f32 %v294, %v721
      %v723 = vpop.f32.mrb[0].mxu0
      %v724 = vadd.f32 %v290, %v723
      %v725 = vpop.f32.mrb[0].mxu0
      %v726 = vadd.f32 %v294, %v725
      %727 = vmatprep.mubr.bf16.mxu0 %v387
      %728 = vmatmul.mubr.bf16.gmra.mrb[0].mxu0 %v386
      %v729 = vpop.f32.mrb[0].mxu0
      %v730 = vadd.f32 %v290, %v729
      %v731 = vpop.f32.mrb[0].mxu0
      %v732 = vadd.f32 %v294, %v731
      %v733 = vpop.f32.mrb[0].mxu0
      %v734 = vadd.f32 %v290, %v733
      %v735 = vpop.f32.mrb[0].mxu0
      %v736 = vadd.f32 %v294, %v735
      %737 = vmatprep.mubr.bf16.mxu0 %v390
      %738 = vmatmul.mubr.bf16.gmra.mrb[0].mxu0 %v389
      %v739 = vpop.f32.mrb[0].mxu0
      %v740 = vadd.f32 %v290, %v739
      %v741 = vpop.f32.mrb[0].mxu0
      %v742 = vadd.f32 %v294, %v741
      %v743 = vpop.f32.mrb[0].mxu0
      %v744 = vadd.f32 %v290, %v743
      %v745 = vpop.f32.mrb[0].mxu0
      %v746 = vadd.f32 %v294, %v745
      %747 = vmatprep.mubr.bf16.mxu0 %v393
      %748 = vmatmul.mubr.bf16.gmra.mrb[0].mxu0 %v392
      %v749 = vpop.f32.mrb[0].mxu0
      %v750 = vadd.f32 %v290, %v749
      %v751 = vpop.f32.mrb[0].mxu0
      %v752 = vadd.f32 %v294, %v751
      %v753 = vpop.f32.mrb[0].mxu0
      %v754 = vadd.f32 %v290, %v753
      %v755 = vpop.f32.mrb[0].mxu0
      %v756 = vadd.f32 %v294, %v755
      %757 = vmatprep.mubr.bf16.mxu0 %v396
      %758 = vmatmul.mubr.bf16.gmra.mrb[0].mxu0 %v395
      %v759 = vpop.f32.mrb[0].mxu0
      %v760 = vadd.f32 %v290, %v759
      %v761 = vpop.f32.mrb[0].mxu0
      %v762 = vadd.f32 %v294, %v761
      %v763 = vpop.f32.mrb[0].mxu0
      %v764 = vadd.f32 %v290, %v763
      %v765 = vpop.f32.mrb[0].mxu0
      %v766 = vadd.f32 %v294, %v765
      %767 = vmatprep.mubr.bf16.mxu0 %v399
      %768 = vmatmul.mubr.bf16.gmra.mrb[0].mxu0 %v398
      %v769 = vpop.f32.mrb[0].mxu0
      %v770 = vadd.f32 %v290, %v769
      %v771 = vpop.f32.mrb[0].mxu0
      %v772 = vadd.f32 %v294, %v771
      %v773 = vpop.f32.mrb[0].mxu0
      %v774 = vadd.f32 %v290, %v773
      %v775 = vpop.f32.mrb[0].mxu0
      %v776 = vadd.f32 %v294, %v775
      %777 = vdwg.mxu0
      %778 = vmatprep.subr.bf16.mxu0 %v602
      %779 = vmatpush1.bf16.msra.mxu0 %v601
      %780 = vmatprep.subr.bf16.mxu0 %v604
      %781 = vmatpush1.bf16.msra.mxu0 %v603
      %782 = vmatprep.subr.bf16.mxu0 %v606
      %783 = vmatpush1.bf16.msra.mxu0 %v605
      %784 = vmatprep.subr.bf16.mxu0 %v608
      %785 = vmatpush1.bf16.msra.mxu0 %v607
      %786 = vmatprep.subr.bf16.mxu0 %v610
      %787 = vmatpush1.bf16.msra.mxu0 %v609
      %788 = vmatprep.subr.bf16.mxu0 %v612
      %789 = vmatpush1.bf16.msra.mxu0 %v611
      %790 = vmatprep.subr.bf16.mxu0 %v614
      %791 = vmatpush1.bf16.msra.mxu0 %v613
      %792 = vmatprep.subr.bf16.mxu0 %v616
      %793 = vmatpush1.bf16.msra.mxu0 %v615
      %794 = vmatprep.subr.bf16.mxu0 0
      %795 = vmatpush1.bf16.msra.mxu0 0
      %796 = vmatprep.subr.bf16.mxu0 0
      %797 = vmatpush1.bf16.msra.mxu0 0
      %798 = vmatprep.subr.bf16.mxu0 0
      %799 = vmatpush1.bf16.msra.mxu0 0
      %800 = vmatprep.subr.bf16.mxu0 0
      %801 = vmatpush1.bf16.msra.mxu0 0
      %802 = vmatprep.subr.bf16.mxu0 0
      %803 = vmatpush1.bf16.msra.mxu0 0
      %804 = vmatprep.subr.bf16.mxu0 0
      %805 = vmatpush1.bf16.msra.mxu0 0
      %806 = vmatprep.subr.bf16.mxu0 0
      %807 = vmatpush1.bf16.msra.mxu0 0
      %808 = vmatprep.subr.bf16.mxu0 0
      %809 = vmatpush1.bf16.msra.mxu0 0
      %810 = vmatprep.mubr.bf16.mxu0 0
      %811 = vmatmul.mubr.bf16.gmra.mrb[0].mxu0 %v379
      %v812 = vpop.f32.mrb[0].mxu0
      %v813 = vadd.f32 %v700, %v812
      %v814 = vpop.f32.mrb[0].mxu0
      %v815 = vadd.f32 %v702, %v814
      %v816 = vpop.f32.mrb[0].mxu0
      %v817 = vadd.f32 %v704, %v816
      %v818 = vpop.f32.mrb[0].mxu0
      %v819 = vadd.f32 %v706, %v818
      %820 = vmatprep.mubr.bf16.mxu0 0
      %821 = vmatmul.mubr.bf16.gmra.mrb[0].mxu0 %v382
      %v822 = vpop.f32.mrb[0].mxu0
      %v823 = vadd.f32 %v710, %v822
      %v824 = vpop.f32.mrb[0].mxu0
      %v825 = vadd.f32 %v712, %v824
      %v826 = vpop.f32.mrb[0].mxu0
      %v827 = vadd.f32 %v714, %v826
      %v828 = vpop.f32.mrb[0].mxu0
      %v829 = vadd.f32 %v716, %v828
      %830 = vmatprep.mubr.bf16.mxu0 0
      %831 = vmatmul.mubr.bf16.gmra.mrb[0].mxu0 %v385
      %v832 = vpop.f32.mrb[0].mxu0
      %v833 = vadd.f32 %v720, %v832
      %v834 = vpop.f32.mrb[0].mxu0
      %v835 = vadd.f32 %v722, %v834
      %v836 = vpop.f32.mrb[0].mxu0
      %v837 = vadd.f32 %v724, %v836
      %v838 = vpop.f32.mrb[0].mxu0
      %v839 = vadd.f32 %v726, %v838
      %840 = vmatprep.mubr.bf16.mxu0 0
      %841 = vmatmul.mubr.bf16.gmra.mrb[0].mxu0 %v388
      %v842 = vpop.f32.mrb[0].mxu0
      %v843 = vadd.f32 %v730, %v842
      %v844 = vpop.f32.mrb[0].mxu0
      %v845 = vadd.f32 %v732, %v844
      %v846 = vpop.f32.mrb[0].mxu0
      %v847 = vadd.f32 %v734, %v846
      %v848 = vpop.f32.mrb[0].mxu0
      %v849 = vadd.f32 %v736, %v848
      %850 = vmatprep.mubr.bf16.mxu0 0
      %851 = vmatmul.mubr.bf16.gmra.mrb[0].mxu0 %v391
      %v852 = vpop.f32.mrb[0].mxu0
      %v853 = vadd.f32 %v740, %v852
      %v854 = vpop.f32.mrb[0].mxu0
      %v855 = vadd.f32 %v742, %v854
      %v856 = vpop.f32.mrb[0].mxu0
      %v857 = vadd.f32 %v744, %v856
      %v858 = vpop.f32.mrb[0].mxu0
      %v859 = vadd.f32 %v746, %v858
      %860 = vmatprep.mubr.bf16.mxu0 0
      %861 = vmatmul.mubr.bf16.gmra.mrb[0].mxu0 %v394
      %v862 = vpop.f32.mrb[0].mxu0
      %v863 = vadd.f32 %v750, %v862
      %v864 = vpop.f32.mrb[0].mxu0
      %v865 = vadd.f32 %v752, %v864
      %v866 = vpop.f32.mrb[0].mxu0
      %v867 = vadd.f32 %v754, %v866
      %v868 = vpop.f32.mrb[0].mxu0
      %v869 = vadd.f32 %v756, %v868
      %870 = vmatprep.mubr.bf16.mxu0 0
      %871 = vmatmul.mubr.bf16.gmra.mrb[0].mxu0 %v397
      %v872 = vpop.f32.mrb[0].mxu0
      %v873 = vadd.f32 %v760, %v872
      %v874 = vpop.f32.mrb[0].mxu0
      %v875 = vadd.f32 %v762, %v874
      %v876 = vpop.f32.mrb[0].mxu0
      %v877 = vadd.f32 %v764, %v876
      %v878 = vpop.f32.mrb[0].mxu0
      %v879 = vadd.f32 %v766, %v878
      %880 = vmatprep.mubr.bf16.mxu0 0
      %881 = vmatmul.mubr.bf16.gmra.mrb[0].mxu0 %v400
      %v882 = vpop.f32.mrb[0].mxu0
      %v883 = vadd.f32 %v770, %v882
      %v884 = vpop.f32.mrb[0].mxu0
      %v885 = vadd.f32 %v772, %v884
      %v886 = vpop.f32.mrb[0].mxu0
      %v887 = vadd.f32 %v774, %v886
      %v888 = vpop.f32.mrb[0].mxu0
      %v889 = vadd.f32 %v776, %v888
      %890 = vdwg.mxu0
      %v891 = vmax.f32 %v813, 0.0
      %v892 = vmax.f32 %v815, 0.0
      %v893 = vmax.f32 %v817, 0.0
      %v894 = vmax.f32 %v819, 0.0
      %v895 = vmax.f32 %v823, 0.0
      %v896 = vmax.f32 %v825, 0.0
      %v897 = vmax.f32 %v827, 0.0
      %v898 = vmax.f32 %v829, 0.0
      %v899 = vmax.f32 %v833, 0.0
      %v900 = vmax.f32 %v835, 0.0
      %v901 = vmax.f32 %v837, 0.0
      %v902 = vmax.f32 %v839, 0.0
      %v903 = vmax.f32 %v843, 0.0
      %v904 = vmax.f32 %v845, 0.0
      %v905 = vmax.f32 %v847, 0.0
      %v906 = vmax.f32 %v849, 0.0
      %v907 = vmax.f32 %v853, 0.0
      %v908 = vmax.f32 %v855, 0.0
      %v909 = vmax.f32 %v857, 0.0
      %v910 = vmax.f32 %v859, 0.0
      %v911 = vmax.f32 %v863, 0.0
      %v912 = vmax.f32 %v865, 0.0
      %v913 = vmax.f32 %v867, 0.0
      %v914 = vmax.f32 %v869, 0.0
      %v915 = vmax.f32 %v873, 0.0
      %v916 = vmax.f32 %v875, 0.0
      %v917 = vmax.f32 %v877, 0.0
      %v918 = vmax.f32 %v879, 0.0
      %v919 = vmax.f32 %v883, 0.0
      %v920 = vmax.f32 %v885, 0.0
      %v921 = vmax.f32 %v887, 0.0
      %v922 = vmax.f32 %v889, 0.0
      %923 = vxpose.xlu0.b32.start [1/16] %v891, 128
      %924 = vxpose.xlu0.b32.cont [2/16] %v893, 128
      %925 = vxpose.xlu0.b32.cont [3/16] %v895, 128
      %926 = vxpose.xlu0.b32.cont [4/16] %v897, 128
      %927 = vxpose.xlu0.b32.cont [5/16] %v899, 128
      %928 = vxpose.xlu0.b32.cont [6/16] %v901, 128
      %929 = vxpose.xlu0.b32.cont [7/16] %v903, 128
      %930 = vxpose.xlu0.b32.cont [8/16] %v905, 128
      %931 = vxpose.xlu0.b32.cont [9/16] %v907, 128
      %932 = vxpose.xlu0.b32.cont [10/16] %v909, 128
      %933 = vxpose.xlu0.b32.cont [11/16] %v911, 128
      %934 = vxpose.xlu0.b32.cont [12/16] %v913, 128
      %935 = vxpose.xlu0.b32.cont [13/16] %v915, 128
      %936 = vxpose.xlu0.b32.cont [14/16] %v917, 128
      %937 = vxpose.xlu0.b32.cont [15/16] %v919, 128
      %938 = vxpose.xlu0.b32.end [16/16] %v921, 128
      %v939 = vpop.trf.xlu0
      %v940 = vpop.trf.xlu0
      %v941 = vpop.trf.xlu0
      %v942 = vpop.trf.xlu0
      %v943 = vpop.trf.xlu0
      %v944 = vpop.trf.xlu0
      %v945 = vpop.trf.xlu0
      %v946 = vpop.trf.xlu0
      %v947 = vpop.trf.xlu0
      %v948 = vpop.trf.xlu0
      %v949 = vpop.trf.xlu0
      %v950 = vpop.trf.xlu0
      %v951 = vpop.trf.xlu0
      %v952 = vpop.trf.xlu0
      %v953 = vpop.trf.xlu0
      %v954 = vpop.trf.xlu0
      %955 = vxpose.xlu0.b32.start [1/16] %v892, 128
      %956 = vxpose.xlu0.b32.cont [2/16] %v894, 128
      %957 = vxpose.xlu0.b32.cont [3/16] %v896, 128
      %958 = vxpose.xlu0.b32.cont [4/16] %v898, 128
      %959 = vxpose.xlu0.b32.cont [5/16] %v900, 128
      %960 = vxpose.xlu0.b32.cont [6/16] %v902, 128
      %961 = vxpose.xlu0.b32.cont [7/16] %v904, 128
      %962 = vxpose.xlu0.b32.cont [8/16] %v906, 128
      %963 = vxpose.xlu0.b32.cont [9/16] %v908, 128
      %964 = vxpose.xlu0.b32.cont [10/16] %v910, 128
      %965 = vxpose.xlu0.b32.cont [11/16] %v912, 128
      %966 = vxpose.xlu0.b32.cont [12/16] %v914, 128
      %967 = vxpose.xlu0.b32.cont [13/16] %v916, 128
      %968 = vxpose.xlu0.b32.cont [14/16] %v918, 128
      %969 = vxpose.xlu0.b32.cont [15/16] %v920, 128
      %970 = vxpose.xlu0.b32.end [16/16] %v922, 128
      %v971 = vpop.trf.xlu0
      %v972 = vpop.trf.xlu0
      %v973 = vpop.trf.xlu0
      %v974 = vpop.trf.xlu0
      %v975 = vpop.trf.xlu0
      %v976 = vpop.trf.xlu0
      %v977 = vpop.trf.xlu0
      %v978 = vpop.trf.xlu0
      %v979 = vpop.trf.xlu0
      %v980 = vpop.trf.xlu0
      %v981 = vpop.trf.xlu0
      %v982 = vpop.trf.xlu0
      %v983 = vpop.trf.xlu0
      %v984 = vpop.trf.xlu0
      %v985 = vpop.trf.xlu0
      %v986 = vpop.trf.xlu0
      %v987 = vmul.f32 %v939, %v939
      %v988 = vmul.f32 %v940, %v940
      %v989 = vmul.f32 %v941, %v941
      %v990 = vmul.f32 %v942, %v942
      %v991 = vmul.f32 %v943, %v943
      %v992 = vmul.f32 %v944, %v944
      %v993 = vmul.f32 %v945, %v945
      %v994 = vmul.f32 %v946, %v946
      %v995 = vmul.f32 %v947, %v947
      %v996 = vmul.f32 %v948, %v948
      %v997 = vmul.f32 %v949, %v949
      %v998 = vmul.f32 %v950, %v950
      %v999 = vmul.f32 %v951, %v951
      %v1000 = vmul.f32 %v952, %v952
      %v1001 = vmul.f32 %v953, %v953
      %v1002 = vmul.f32 %v954, %v954
      %v1003 = vmul.f32 %v971, %v971
      %v1004 = vmul.f32 %v972, %v972
      %v1005 = vmul.f32 %v973, %v973
      %v1006 = vmul.f32 %v974, %v974
      %v1007 = vmul.f32 %v975, %v975
      %v1008 = vmul.f32 %v976, %v976
      %v1009 = vmul.f32 %v977, %v977
      %v1010 = vmul.f32 %v978, %v978
      %v1011 = vmul.f32 %v979, %v979
      %v1012 = vmul.f32 %v980, %v980
      %v1013 = vmul.f32 %v981, %v981
      %v1014 = vmul.f32 %v982, %v982
      %v1015 = vmul.f32 %v983, %v983
      %v1016 = vmul.f32 %v984, %v984
      %v1017 = vmul.f32 %v985, %v985
      %v1018 = vmul.f32 %v986, %v986
      %v1019 = vadd.f32 %v987, %v988
      %v1020 = vadd.f32 %v1019, %v989
      %v1021 = vadd.f32 %v1020, %v990
      %v1022 = vadd.f32 %v1021, %v991
      %v1023 = vadd.f32 %v1022, %v992
      %v1024 = vadd.f32 %v1023, %v993
      %v1025 = vadd.f32 %v1024, %v994
      %v1026 = vadd.f32 %v1025, %v995
      %v1027 = vadd.f32 %v1026, %v996
      %v1028 = vadd.f32 %v1027, %v997
      %v1029 = vadd.f32 %v1028, %v998
      %v1030 = vadd.f32 %v1029, %v999
      %v1031 = vadd.f32 %v1030, %v1000
      %v1032 = vadd.f32 %v1031, %v1001
      %v1033 = vadd.f32 %v1032, %v1002
      %v1034 = vadd.f32 %v1033, %v1003
      %v1035 = vadd.f32 %v1034, %v1004
      %v1036 = vadd.f32 %v1035, %v1005
      %v1037 = vadd.f32 %v1036, %v1006
      %v1038 = vadd.f32 %v1037, %v1007
      %v1039 = vadd.f32 %v1038, %v1008
      %v1040 = vadd.f32 %v1039, %v1009
      %v1041 = vadd.f32 %v1040, %v1010
      %v1042 = vadd.f32 %v1041, %v1011
      %v1043 = vadd.f32 %v1042, %v1012
      %v1044 = vadd.f32 %v1043, %v1013
      %v1045 = vadd.f32 %v1044, %v1014
      %v1046 = vadd.f32 %v1045, %v1015
      %v1047 = vadd.f32 %v1046, %v1016
      %v1048 = vadd.f32 %v1047, %v1017
      %v1049 = vadd.f32 %v1048, %v1018
      %v1050 = vrot.slane %v1049, 4
      %v1051 = vadd.f32 %v1049, %v1050
      %v1052 = vrot.slane %v1051, 2
      %v1053 = vadd.f32 %v1051, %v1052
      %v1054 = vrot.slane %v1053, 1
      %v1055 = vadd.f32 %v1053, %v1054
      %v1056 = vld [vmem:[%s196] sm:$0xff]
      %v1057 = vld [vmem:[%s196 + $0x8] sm:$0xf]
      %v1058 = vld [vmem:[%s196 + $0xc] sm:$0xff]
      %v1059 = vld [vmem:[%s196 + $0x14] sm:$0xf]
      %v1060 = vld [vmem:[%s196 + $0x18] sm:$0xff]
      %v1061 = vld [vmem:[%s196 + $0x20] sm:$0xf]
      %v1062 = vld [vmem:[%s196 + $0x24] sm:$0xff]
      %v1063 = vld [vmem:[%s196 + $0x2c] sm:$0xf]
      %v1064 = vld [vmem:[%s196 + $0x30] sm:$0xff]
      %v1065 = vld [vmem:[%s196 + $0x38] sm:$0xf]
      %v1066 = vld [vmem:[%s196 + $0x3c] sm:$0xff]
      %v1067 = vld [vmem:[%s196 + $0x44] sm:$0xf]
      %v1068 = vld [vmem:[%s196 + $0x48] sm:$0xff]
      %v1069 = vld [vmem:[%s196 + $0x50] sm:$0xf]
      %v1070 = vld [vmem:[%s196 + $0x54] sm:$0xff]
      %v1071 = vld [vmem:[%s196 + $0x5c] sm:$0xf]
      %v1072 = vld [vmem:[%s196 + $0x60] sm:$0xff]
      %v1073 = vld [vmem:[%s196 + $0x68] sm:$0xf]
      %v1074 = vld [vmem:[%s196 + $0x6c] sm:$0xff]
      %v1075 = vld [vmem:[%s196 + $0x74] sm:$0xf]
      %v1076 = vld [vmem:[%s196 + $0x78] sm:$0xff]
      %v1077 = vld [vmem:[%s196 + $0x80] sm:$0xf]
      %v1078 = vld [vmem:[%s196 + $0x84] sm:$0xff]
      %v1079 = vld [vmem:[%s196 + $0x8c] sm:$0xf]
      %v1080 = vld [vmem:[%s196 + $0x90] sm:$0xff]
      %v1081 = vld [vmem:[%s196 + $0x98] sm:$0xf]
      %v1082 = vld [vmem:[%s196 + $0x9c] sm:$0xff]
      %v1083 = vld [vmem:[%s196 + $0xa4] sm:$0xf]
      %v1084 = vld [vmem:[%s196 + $0xa8] sm:$0xff]
      %v1085 = vld [vmem:[%s196 + $0xb0] sm:$0xf]
      %v1086 = vld [vmem:[%s196 + $0xb4] sm:$0xff]
      %v1087 = vld [vmem:[%s196 + $0xbc] sm:$0xf]
      %v1120 = vunpack.c.l.b16 %v1056
      %v1121 = vunpack.c.h.b16 %v1056
      %v1122 = vunpack.c.l.b16 %v1057
      %v1123 = vunpack.c.l.b16 %v1058
      %v1124 = vunpack.c.h.b16 %v1058
      %v1125 = vunpack.c.l.b16 %v1059
      %v1126 = vunpack.c.l.b16 %v1060
      %v1127 = vunpack.c.h.b16 %v1060
      %v1128 = vunpack.c.l.b16 %v1061
      %v1129 = vunpack.c.l.b16 %v1062
      %v1130 = vunpack.c.h.b16 %v1062
      %v1131 = vunpack.c.l.b16 %v1063
      %v1132 = vunpack.c.l.b16 %v1064
      %v1133 = vunpack.c.h.b16 %v1064
      %v1134 = vunpack.c.l.b16 %v1065
      %v1135 = vunpack.c.l.b16 %v1066
      %v1136 = vunpack.c.h.b16 %v1066
      %v1137 = vunpack.c.l.b16 %v1067
      %v1138 = vunpack.c.l.b16 %v1068
      %v1139 = vunpack.c.h.b16 %v1068
      %v1140 = vunpack.c.l.b16 %v1069
      %v1141 = vunpack.c.l.b16 %v1070
      %v1142 = vunpack.c.h.b16 %v1070
      %v1143 = vunpack.c.l.b16 %v1071
      %v1144 = vunpack.c.l.b16 %v1072
      %v1145 = vunpack.c.h.b16 %v1072
      %v1146 = vunpack.c.l.b16 %v1073
      %v1147 = vunpack.c.l.b16 %v1074
      %v1148 = vunpack.c.h.b16 %v1074
      %v1149 = vunpack.c.l.b16 %v1075
      %v1150 = vunpack.c.l.b16 %v1076
      %v1151 = vunpack.c.h.b16 %v1076
      %v1152 = vunpack.c.l.b16 %v1077
      %v1153 = vunpack.c.l.b16 %v1078
      %v1154 = vunpack.c.h.b16 %v1078
      %v1155 = vunpack.c.l.b16 %v1079
      %v1156 = vunpack.c.l.b16 %v1080
      %v1157 = vunpack.c.h.b16 %v1080
      %v1158 = vunpack.c.l.b16 %v1081
      %v1159 = vunpack.c.l.b16 %v1082
      %v1160 = vunpack.c.h.b16 %v1082
      %v1161 = vunpack.c.l.b16 %v1083
      %v1162 = vunpack.c.l.b16 %v1084
      %v1163 = vunpack.c.h.b16 %v1084
      %v1164 = vunpack.c.l.b16 %v1085
      %v1165 = vunpack.c.l.b16 %v1086
      %v1166 = vunpack.c.h.b16 %v1086
      %v1167 = vunpack.c.l.b16 %v1087
      %v1168 = vpack.c.b16 %v1123, %v1120
      %v1169 = vpack.c.b16 %v1124, %v1121
      %v1170 = vpack.c.b16 %v1125, %v1122
      %v1171 = vpack.c.b16 %v1129, %v1126
      %v1172 = vpack.c.b16 %v1130, %v1127
      %v1173 = vpack.c.b16 %v1131, %v1128
      %v1174 = vpack.c.b16 %v1135, %v1132
      %v1175 = vpack.c.b16 %v1136, %v1133
      %v1176 = vpack.c.b16 %v1137, %v1134
      %v1177 = vpack.c.b16 %v1141, %v1138
      %v1178 = vpack.c.b16 %v1142, %v1139
      %v1179 = vpack.c.b16 %v1143, %v1140
      %v1180 = vpack.c.b16 %v1147, %v1144
      %v1181 = vpack.c.b16 %v1148, %v1145
      %v1182 = vpack.c.b16 %v1149, %v1146
      %v1183 = vpack.c.b16 %v1153, %v1150
      %v1184 = vpack.c.b16 %v1154, %v1151
      %v1185 = vpack.c.b16 %v1155, %v1152
      %v1186 = vpack.c.b16 %v1159, %v1156
      %v1187 = vpack.c.b16 %v1160, %v1157
      %v1188 = vpack.c.b16 %v1161, %v1158
      %v1189 = vpack.c.b16 %v1165, %v1162
      %v1190 = vpack.c.b16 %v1166, %v1163
      %v1191 = vpack.c.b16 %v1167, %v1164
      %1216 = vmatprep.subr.bf16.mxu0 %v570
      %1217 = vmatpush1.bf16.msra.mxu0 %v569
      %1218 = vmatprep.subr.bf16.mxu0 %v572
      %1219 = vmatpush1.bf16.msra.mxu0 %v571
      %1220 = vmatprep.subr.bf16.mxu0 %v574
      %1221 = vmatpush1.bf16.msra.mxu0 %v573
      %1222 = vmatprep.subr.bf16.mxu0 %v576
      %1223 = vmatpush1.bf16.msra.mxu0 %v575
      %1224 = vmatprep.subr.bf16.mxu0 %v578
      %1225 = vmatpush1.bf16.msra.mxu0 %v577
      %1226 = vmatprep.subr.bf16.mxu0 %v580
      %1227 = vmatpush1.bf16.msra.mxu0 %v579
      %1228 = vmatprep.subr.bf16.mxu0 %v582
      %1229 = vmatpush1.bf16.msra.mxu0 %v581
      %1230 = vmatprep.subr.bf16.mxu0 %v584
      %1231 = vmatpush1.bf16.msra.mxu0 %v583
      %1232 = vmatprep.subr.bf16.mxu0 %v586
      %1233 = vmatpush1.bf16.msra.mxu0 %v585
      %1234 = vmatprep.subr.bf16.mxu0 %v588
      %1235 = vmatpush1.bf16.msra.mxu0 %v587
      %1236 = vmatprep.subr.bf16.mxu0 %v590
      %1237 = vmatpush1.bf16.msra.mxu0 %v589
      %1238 = vmatprep.subr.bf16.mxu0 %v592
      %1239 = vmatpush1.bf16.msra.mxu0 %v591
      %1240 = vmatprep.subr.bf16.mxu0 %v594
      %1241 = vmatpush1.bf16.msra.mxu0 %v593
      %1242 = vmatprep.subr.bf16.mxu0 %v596
      %1243 = vmatpush1.bf16.msra.mxu0 %v595
      %1244 = vmatprep.subr.bf16.mxu0 %v598
      %1245 = vmatpush1.bf16.msra.mxu0 %v597
      %1246 = vmatprep.subr.bf16.mxu0 %v600
      %1247 = vmatpush1.bf16.msra.mxu0 %v599
      %1248 = vmatprep.mubr.bf16.mxu0 %v1169
      %1249 = vmatmul.mubr.bf16.gmra.mrb[0].mxu0 %v1168
      %v1250 = vpop.f32.mrb[0].mxu0
      %v1251 = vadd.f32 %v290, %v1250
      %v1252 = vpop.f32.mrb[0].mxu0
      %v1253 = vadd.f32 %v294, %v1252
      %v1254 = vpop.f32.mrb[0].mxu0
      %v1255 = vadd.f32 %v290, %v1254
      %v1256 = vpop.f32.mrb[0].mxu0
      %v1257 = vadd.f32 %v294, %v1256
      %1258 = vmatprep.mubr.bf16.mxu0 %v1172
      %1259 = vmatmul.mubr.bf16.gmra.mrb[0].mxu0 %v1171
      %v1260 = vpop.f32.mrb[0].mxu0
      %v1261 = vadd.f32 %v290, %v1260
      %v1262 = vpop.f32.mrb[0].mxu0
      %v1263 = vadd.f32 %v294, %v1262
      %v1264 = vpop.f32.mrb[0].mxu0
      %v1265 = vadd.f32 %v290, %v1264
      %v1266 = vpop.f32.mrb[0].mxu0
      %v1267 = vadd.f32 %v294, %v1266
      %1268 = vmatprep.mubr.bf16.mxu0 %v1175
      %1269 = vmatmul.mubr.bf16.gmra.mrb[0].mxu0 %v1174
      %v1270 = vpop.f32.mrb[0].mxu0
      %v1271 = vadd.f32 %v290, %v1270
      %v1272 = vpop.f32.mrb[0].mxu0
      %v1273 = vadd.f32 %v294, %v1272
      %v1274 = vpop.f32.mrb[0].mxu0
      %v1275 = vadd.f32 %v290, %v1274
      %v1276 = vpop.f32.mrb[0].mxu0
      %v1277 = vadd.f32 %v294, %v1276
      %1278 = vmatprep.mubr.bf16.mxu0 %v1178
      %1279 = vmatmul.mubr.bf16.gmra.mrb[0].mxu0 %v1177
      %v1280 = vpop.f32.mrb[0].mxu0
      %v1281 = vadd.f32 %v290, %v1280
      %v1282 = vpop.f32.mrb[0].mxu0
      %v1283 = vadd.f32 %v294, %v1282
      %v1284 = vpop.f32.mrb[0].mxu0
      %v1285 = vadd.f32 %v290, %v1284
      %v1286 = vpop.f32.mrb[0].mxu0
      %v1287 = vadd.f32 %v294, %v1286
      %1288 = vmatprep.mubr.bf16.mxu0 %v1181
      %1289 = vmatmul.mubr.bf16.gmra.mrb[0].mxu0 %v1180
      %v1290 = vpop.f32.mrb[0].mxu0
      %v1291 = vadd.f32 %v290, %v1290
      %v1292 = vpop.f32.mrb[0].mxu0
      %v1293 = vadd.f32 %v294, %v1292
      %v1294 = vpop.f32.mrb[0].mxu0
      %v1295 = vadd.f32 %v290, %v1294
      %v1296 = vpop.f32.mrb[0].mxu0
      %v1297 = vadd.f32 %v294, %v1296
      %1298 = vmatprep.mubr.bf16.mxu0 %v1184
      %1299 = vmatmul.mubr.bf16.gmra.mrb[0].mxu0 %v1183
      %v1300 = vpop.f32.mrb[0].mxu0
      %v1301 = vadd.f32 %v290, %v1300
      %v1302 = vpop.f32.mrb[0].mxu0
      %v1303 = vadd.f32 %v294, %v1302
      %v1304 = vpop.f32.mrb[0].mxu0
      %v1305 = vadd.f32 %v290, %v1304
      %v1306 = vpop.f32.mrb[0].mxu0
      %v1307 = vadd.f32 %v294, %v1306
      %1308 = vmatprep.mubr.bf16.mxu0 %v1187
      %1309 = vmatmul.mubr.bf16.gmra.mrb[0].mxu0 %v1186
      %v1310 = vpop.f32.mrb[0].mxu0
      %v1311 = vadd.f32 %v290, %v1310
      %v1312 = vpop.f32.mrb[0].mxu0
      %v1313 = vadd.f32 %v294, %v1312
      %v1314 = vpop.f32.mrb[0].mxu0
      %v1315 = vadd.f32 %v290, %v1314
      %v1316 = vpop.f32.mrb[0].mxu0
      %v1317 = vadd.f32 %v294, %v1316
      %1318 = vmatprep.mubr.bf16.mxu0 %v1190
      %1319 = vmatmul.mubr.bf16.gmra.mrb[0].mxu0 %v1189
      %v1320 = vpop.f32.mrb[0].mxu0
      %v1321 = vadd.f32 %v290, %v1320
      %v1322 = vpop.f32.mrb[0].mxu0
      %v1323 = vadd.f32 %v294, %v1322
      %v1324 = vpop.f32.mrb[0].mxu0
      %v1325 = vadd.f32 %v290, %v1324
      %v1326 = vpop.f32.mrb[0].mxu0
      %v1327 = vadd.f32 %v294, %v1326
      %1328 = vdwg.mxu0
      %1329 = vmatprep.subr.bf16.mxu0 %v602
      %1330 = vmatpush1.bf16.msra.mxu0 %v601
      %1331 = vmatprep.subr.bf16.mxu0 %v604
      %1332 = vmatpush1.bf16.msra.mxu0 %v603
      %1333 = vmatprep.subr.bf16.mxu0 %v606
      %1334 = vmatpush1.bf16.msra.mxu0 %v605
      %1335 = vmatprep.subr.bf16.mxu0 %v608
      %1336 = vmatpush1.bf16.msra.mxu0 %v607
      %1337 = vmatprep.subr.bf16.mxu0 %v610
      %1338 = vmatpush1.bf16.msra.mxu0 %v609
      %1339 = vmatprep.subr.bf16.mxu0 %v612
      %1340 = vmatpush1.bf16.msra.mxu0 %v611
      %1341 = vmatprep.subr.bf16.mxu0 %v614
      %1342 = vmatpush1.bf16.msra.mxu0 %v613
      %1343 = vmatprep.subr.bf16.mxu0 %v616
      %1344 = vmatpush1.bf16.msra.mxu0 %v615
      %1345 = vmatprep.subr.bf16.mxu0 0
      %1346 = vmatpush1.bf16.msra.mxu0 0
      %1347 = vmatprep.subr.bf16.mxu0 0
      %1348 = vmatpush1.bf16.msra.mxu0 0
      %1349 = vmatprep.subr.bf16.mxu0 0
      %1350 = vmatpush1.bf16.msra.mxu0 0
      %1351 = vmatprep.subr.bf16.mxu0 0
      %1352 = vmatpush1.bf16.msra.mxu0 0
      %1353 = vmatprep.subr.bf16.mxu0 0
      %1354 = vmatpush1.bf16.msra.mxu0 0
      %1355 = vmatprep.subr.bf16.mxu0 0
      %1356 = vmatpush1.bf16.msra.mxu0 0
      %1357 = vmatprep.subr.bf16.mxu0 0
      %1358 = vmatpush1.bf16.msra.mxu0 0
      %1359 = vmatprep.subr.bf16.mxu0 0
      %1360 = vmatpush1.bf16.msra.mxu0 0
      %1361 = vmatprep.mubr.bf16.mxu0 0
      %1362 = vmatmul.mubr.bf16.gmra.mrb[0].mxu0 %v1170
      %v1363 = vpop.f32.mrb[0].mxu0
      %v1364 = vadd.f32 %v1251, %v1363
      %v1365 = vpop.f32.mrb[0].mxu0
      %v1366 = vadd.f32 %v1253, %v1365
      %v1367 = vpop.f32.mrb[0].mxu0
      %v1368 = vadd.f32 %v1255, %v1367
      %v1369 = vpop.f32.mrb[0].mxu0
      %v1370 = vadd.f32 %v1257, %v1369
      %1371 = vmatprep.mubr.bf16.mxu0 0
      %1372 = vmatmul.mubr.bf16.gmra.mrb[0].mxu0 %v1173
      %v1373 = vpop.f32.mrb[0].mxu0
      %v1374 = vadd.f32 %v1261, %v1373
      %v1375 = vpop.f32.mrb[0].mxu0
      %v1376 = vadd.f32 %v1263, %v1375
      %v1377 = vpop.f32.mrb[0].mxu0
      %v1378 = vadd.f32 %v1265, %v1377
      %v1379 = vpop.f32.mrb[0].mxu0
      %v1380 = vadd.f32 %v1267, %v1379
      %1381 = vmatprep.mubr.bf16.mxu0 0
      %1382 = vmatmul.mubr.bf16.gmra.mrb[0].mxu0 %v1176
      %v1383 = vpop.f32.mrb[0].mxu0
      %v1384 = vadd.f32 %v1271, %v1383
      %v1385 = vpop.f32.mrb[0].mxu0
      %v1386 = vadd.f32 %v1273, %v1385
      %v1387 = vpop.f32.mrb[0].mxu0
      %v1388 = vadd.f32 %v1275, %v1387
      %v1389 = vpop.f32.mrb[0].mxu0
      %v1390 = vadd.f32 %v1277, %v1389
      %1391 = vmatprep.mubr.bf16.mxu0 0
      %1392 = vmatmul.mubr.bf16.gmra.mrb[0].mxu0 %v1179
      %v1393 = vpop.f32.mrb[0].mxu0
      %v1394 = vadd.f32 %v1281, %v1393
      %v1395 = vpop.f32.mrb[0].mxu0
      %v1396 = vadd.f32 %v1283, %v1395
      %v1397 = vpop.f32.mrb[0].mxu0
      %v1398 = vadd.f32 %v1285, %v1397
      %v1399 = vpop.f32.mrb[0].mxu0
      %v1400 = vadd.f32 %v1287, %v1399
      %1401 = vmatprep.mubr.bf16.mxu0 0
      %1402 = vmatmul.mubr.bf16.gmra.mrb[0].mxu0 %v1182
      %v1403 = vpop.f32.mrb[0].mxu0
      %v1404 = vadd.f32 %v1291, %v1403
      %v1405 = vpop.f32.mrb[0].mxu0
      %v1406 = vadd.f32 %v1293, %v1405
      %v1407 = vpop.f32.mrb[0].mxu0
      %v1408 = vadd.f32 %v1295, %v1407
      %v1409 = vpop.f32.mrb[0].mxu0
      %v1410 = vadd.f32 %v1297, %v1409
      %1411 = vmatprep.mubr.bf16.mxu0 0
      %1412 = vmatmul.mubr.bf16.gmra.mrb[0].mxu0 %v1185
      %v1413 = vpop.f32.mrb[0].mxu0
      %v1414 = vadd.f32 %v1301, %v1413
      %v1415 = vpop.f32.mrb[0].mxu0
      %v1416 = vadd.f32 %v1303, %v1415
      %v1417 = vpop.f32.mrb[0].mxu0
      %v1418 = vadd.f32 %v1305, %v1417
      %v1419 = vpop.f32.mrb[0].mxu0
      %v1420 = vadd.f32 %v1307, %v1419
      %1421 = vmatprep.mubr.bf16.mxu0 0
      %1422 = vmatmul.mubr.bf16.gmra.mrb[0].mxu0 %v1188
      %v1423 = vpop.f32.mrb[0].mxu0
      %v1424 = vadd.f32 %v1311, %v1423
      %v1425 = vpop.f32.mrb[0].mxu0
      %v1426 = vadd.f32 %v1313, %v1425
      %v1427 = vpop.f32.mrb[0].mxu0
      %v1428 = vadd.f32 %v1315, %v1427
      %v1429 = vpop.f32.mrb[0].mxu0
      %v1430 = vadd.f32 %v1317, %v1429
      %1431 = vmatprep.mubr.bf16.mxu0 0
      %1432 = vmatmul.mubr.bf16.gmra.mrb[0].mxu0 %v1191
      %v1433 = vpop.f32.mrb[0].mxu0
      %v1434 = vadd.f32 %v1321, %v1433
      %v1435 = vpop.f32.mrb[0].mxu0
      %v1436 = vadd.f32 %v1323, %v1435
      %v1437 = vpop.f32.mrb[0].mxu0
      %v1438 = vadd.f32 %v1325, %v1437
      %v1439 = vpop.f32.mrb[0].mxu0
      %v1440 = vadd.f32 %v1327, %v1439
      %1441 = vdwg.mxu0
      %v1442 = vmax.f32 %v1364, 0.0
      %v1443 = vmax.f32 %v1366, 0.0
      %v1444 = vmax.f32 %v1368, 0.0
      %v1445 = vmax.f32 %v1370, 0.0
      %v1446 = vmax.f32 %v1374, 0.0
      %v1447 = vmax.f32 %v1376, 0.0
      %v1448 = vmax.f32 %v1378, 0.0
      %v1449 = vmax.f32 %v1380, 0.0
      %v1450 = vmax.f32 %v1384, 0.0
      %v1451 = vmax.f32 %v1386, 0.0
      %v1452 = vmax.f32 %v1388, 0.0
      %v1453 = vmax.f32 %v1390, 0.0
      %v1454 = vmax.f32 %v1394, 0.0
      %v1455 = vmax.f32 %v1396, 0.0
      %v1456 = vmax.f32 %v1398, 0.0
      %v1457 = vmax.f32 %v1400, 0.0
      %v1458 = vmax.f32 %v1404, 0.0
      %v1459 = vmax.f32 %v1406, 0.0
      %v1460 = vmax.f32 %v1408, 0.0
      %v1461 = vmax.f32 %v1410, 0.0
      %v1462 = vmax.f32 %v1414, 0.0
      %v1463 = vmax.f32 %v1416, 0.0
      %v1464 = vmax.f32 %v1418, 0.0
      %v1465 = vmax.f32 %v1420, 0.0
      %v1466 = vmax.f32 %v1424, 0.0
      %v1467 = vmax.f32 %v1426, 0.0
      %v1468 = vmax.f32 %v1428, 0.0
      %v1469 = vmax.f32 %v1430, 0.0
      %v1470 = vmax.f32 %v1434, 0.0
      %v1471 = vmax.f32 %v1436, 0.0
      %v1472 = vmax.f32 %v1438, 0.0
      %v1473 = vmax.f32 %v1440, 0.0
      %v1474 = vmul.f32 %v1442, %v1442
      %v1475 = vmul.f32 %v1443, %v1443
      %v1476 = vmul.f32 %v1444, %v1444
      %v1477 = vmul.f32 %v1445, %v1445
      %v1478 = vmul.f32 %v1446, %v1446
      %v1479 = vmul.f32 %v1447, %v1447
      %v1480 = vmul.f32 %v1448, %v1448
      %v1481 = vmul.f32 %v1449, %v1449
      %v1482 = vmul.f32 %v1450, %v1450
      %v1483 = vmul.f32 %v1451, %v1451
      %v1484 = vmul.f32 %v1452, %v1452
      %v1485 = vmul.f32 %v1453, %v1453
      %v1486 = vmul.f32 %v1454, %v1454
      %v1487 = vmul.f32 %v1455, %v1455
      %v1488 = vmul.f32 %v1456, %v1456
      %v1489 = vmul.f32 %v1457, %v1457
      %v1490 = vmul.f32 %v1458, %v1458
      %v1491 = vmul.f32 %v1459, %v1459
      %v1492 = vmul.f32 %v1460, %v1460
      %v1493 = vmul.f32 %v1461, %v1461
      %v1494 = vmul.f32 %v1462, %v1462
      %v1495 = vmul.f32 %v1463, %v1463
      %v1496 = vmul.f32 %v1464, %v1464
      %v1497 = vmul.f32 %v1465, %v1465
      %v1498 = vmul.f32 %v1466, %v1466
      %v1499 = vmul.f32 %v1467, %v1467
      %v1500 = vmul.f32 %v1468, %v1468
      %v1501 = vmul.f32 %v1469, %v1469
      %v1502 = vmul.f32 %v1470, %v1470
      %v1503 = vmul.f32 %v1471, %v1471
      %v1504 = vmul.f32 %v1472, %v1472
      %v1505 = vmul.f32 %v1473, %v1473
      %v1506 = vadd.f32 %v1474, %v1475
      %1507 = vadd.xlane.f32.xlu0 %v1506
      %v1508 = vpop.xlane.xlu0 %1507
      %v1509 = vadd.f32 %v1476, %v1477
      %1510 = vadd.xlane.f32.xlu0 %v1509
      %v1511 = vpop.xlane.xlu0 %1510
      %v1512 = vadd.f32 %v1478, %v1479
      %1513 = vadd.xlane.f32.xlu0 %v1512
      %v1514 = vpop.xlane.xlu0 %1513
      %v1515 = vadd.f32 %v1480, %v1481
      %1516 = vadd.xlane.f32.xlu0 %v1515
      %v1517 = vpop.xlane.xlu0 %1516
      %v1518 = vadd.f32 %v1482, %v1483
      %1519 = vadd.xlane.f32.xlu0 %v1518
      %v1520 = vpop.xlane.xlu0 %1519
      %v1521 = vadd.f32 %v1484, %v1485
      %1522 = vadd.xlane.f32.xlu0 %v1521
      %v1523 = vpop.xlane.xlu0 %1522
      %v1524 = vadd.f32 %v1486, %v1487
      %1525 = vadd.xlane.f32.xlu0 %v1524
      %v1526 = vpop.xlane.xlu0 %1525
      %v1527 = vadd.f32 %v1488, %v1489
      %1528 = vadd.xlane.f32.xlu0 %v1527
      %v1529 = vpop.xlane.xlu0 %1528
      %v1530 = vadd.f32 %v1490, %v1491
      %1531 = vadd.xlane.f32.xlu0 %v1530
      %v1532 = vpop.xlane.xlu0 %1531
      %v1533 = vadd.f32 %v1492, %v1493
      %1534 = vadd.xlane.f32.xlu0 %v1533
      %v1535 = vpop.xlane.xlu0 %1534
      %v1536 = vadd.f32 %v1494, %v1495
      %1537 = vadd.xlane.f32.xlu0 %v1536
      %v1538 = vpop.xlane.xlu0 %1537
      %v1539 = vadd.f32 %v1496, %v1497
      %1540 = vadd.xlane.f32.xlu0 %v1539
      %v1541 = vpop.xlane.xlu0 %1540
      %v1542 = vadd.f32 %v1498, %v1499
      %1543 = vadd.xlane.f32.xlu0 %v1542
      %v1544 = vpop.xlane.xlu0 %1543
      %v1545 = vadd.f32 %v1500, %v1501
      %1546 = vadd.xlane.f32.xlu0 %v1545
      %v1547 = vpop.xlane.xlu0 %1546
      %v1548 = vadd.f32 %v1502, %v1503
      %1549 = vadd.xlane.f32.xlu0 %v1548
      %v1550 = vpop.xlane.xlu0 %1549
      %v1551 = vadd.f32 %v1504, %v1505
      %1552 = vadd.xlane.f32.xlu0 %v1551
      %v1553 = vpop.xlane.xlu0 %1552
      %1554 = vmatprep.subr.mxu0 0.0
      %1555 = vmatpush1.msra.mxu0 %v939
      %1556 = vmatprep.subr.mxu0 0.0
      %1557 = vmatpush1.msra.mxu0 %v940
      %1558 = vmatprep.subr.mxu0 0.0
      %1559 = vmatpush1.msra.mxu0 %v941
      %1560 = vmatprep.subr.mxu0 0.0
      %1561 = vmatpush1.msra.mxu0 %v942
      %1562 = vmatprep.subr.mxu0 0.0
      %1563 = vmatpush1.msra.mxu0 %v943
      %1564 = vmatprep.subr.mxu0 0.0
      %1565 = vmatpush1.msra.mxu0 %v944
      %1566 = vmatprep.subr.mxu0 0.0
      %1567 = vmatpush1.msra.mxu0 %v945
      %1568 = vmatprep.subr.mxu0 0.0
      %1569 = vmatpush1.msra.mxu0 %v946
      %1570 = vmatprep.subr.mxu0 0.0
      %1571 = vmatpush1.msra.mxu0 %v947
      %1572 = vmatprep.subr.mxu0 0.0
      %1573 = vmatpush1.msra.mxu0 %v948
      %1574 = vmatprep.subr.mxu0 0.0
      %1575 = vmatpush1.msra.mxu0 %v949
      %1576 = vmatprep.subr.mxu0 0.0
      %1577 = vmatpush1.msra.mxu0 %v950
      %1578 = vmatprep.subr.mxu0 0.0
      %1579 = vmatpush1.msra.mxu0 %v951
      %1580 = vmatprep.subr.mxu0 0.0
      %1581 = vmatpush1.msra.mxu0 %v952
      %1582 = vmatprep.subr.mxu0 0.0
      %1583 = vmatpush1.msra.mxu0 %v953
      %1584 = vmatprep.subr.mxu0 0.0
      %1585 = vmatpush1.msra.mxu0 %v954
      %1586 = vmatprep.subr.mxu0 0.0
      %1587 = vmatpush1.msra.mxu0 %v971
      %1588 = vmatprep.subr.mxu0 0.0
      %1589 = vmatpush1.msra.mxu0 %v972
      %1590 = vmatprep.subr.mxu0 0.0
      %1591 = vmatpush1.msra.mxu0 %v973
      %1592 = vmatprep.subr.mxu0 0.0
      %1593 = vmatpush1.msra.mxu0 %v974
      %1594 = vmatprep.subr.mxu0 0.0
      %1595 = vmatpush1.msra.mxu0 %v975
      %1596 = vmatprep.subr.mxu0 0.0
      %1597 = vmatpush1.msra.mxu0 %v976
      %1598 = vmatprep.subr.mxu0 0.0
      %1599 = vmatpush1.msra.mxu0 %v977
      %1600 = vmatprep.subr.mxu0 0.0
      %1601 = vmatpush1.msra.mxu0 %v978
      %1602 = vmatprep.subr.mxu0 0.0
      %1603 = vmatpush1.msra.mxu0 %v979
      %1604 = vmatprep.subr.mxu0 0.0
      %1605 = vmatpush1.msra.mxu0 %v980
      %1606 = vmatprep.subr.mxu0 0.0
      %1607 = vmatpush1.msra.mxu0 %v981
      %1608 = vmatprep.subr.mxu0 0.0
      %1609 = vmatpush1.msra.mxu0 %v982
      %1610 = vmatprep.subr.mxu0 0.0
      %1611 = vmatpush1.msra.mxu0 %v983
      %1612 = vmatprep.subr.mxu0 0.0
      %1613 = vmatpush1.msra.mxu0 %v984
      %1614 = vmatprep.subr.mxu0 0.0
      %1615 = vmatpush1.msra.mxu0 %v985
      %1616 = vmatprep.subr.mxu0 0.0
      %1617 = vmatpush1.msra.mxu0 %v986
      %1618 = vmatprep.mubr.f32.mxu0 %v1443
      %1619 = vmatmul.mubr.f32.gmra.mrb[0].mxu0 %v1442
      %v1620 = vpop.f32.mrb[0].mxu0
      %v1621 = vadd.f32 0.0, %v1620
      %v1622 = vpop.f32.mrb[0].mxu0
      %1623 = vmatprep.mubr.f32.mxu0 %v1445
      %1624 = vmatmul.mubr.f32.gmra.mrb[0].mxu0 %v1444
      %v1625 = vpop.f32.mrb[0].mxu0
      %v1626 = vadd.f32 0.0, %v1625
      %v1627 = vpop.f32.mrb[0].mxu0
      %1628 = vmatprep.mubr.f32.mxu0 %v1447
      %1629 = vmatmul.mubr.f32.gmra.mrb[0].mxu0 %v1446
      %v1630 = vpop.f32.mrb[0].mxu0
      %v1631 = vadd.f32 0.0, %v1630
      %v1632 = vpop.f32.mrb[0].mxu0
      %1633 = vmatprep.mubr.f32.mxu0 %v1449
      %1634 = vmatmul.mubr.f32.gmra.mrb[0].mxu0 %v1448
      %v1635 = vpop.f32.mrb[0].mxu0
      %v1636 = vadd.f32 0.0, %v1635
      %v1637 = vpop.f32.mrb[0].mxu0
      %1638 = vmatprep.mubr.f32.mxu0 %v1451
      %1639 = vmatmul.mubr.f32.gmra.mrb[0].mxu0 %v1450
      %v1640 = vpop.f32.mrb[0].mxu0
      %v1641 = vadd.f32 0.0, %v1640
      %v1642 = vpop.f32.mrb[0].mxu0
      %1643 = vmatprep.mubr.f32.mxu0 %v1453
      %1644 = vmatmul.mubr.f32.gmra.mrb[0].mxu0 %v1452
      %v1645 = vpop.f32.mrb[0].mxu0
      %v1646 = vadd.f32 0.0, %v1645
      %v1647 = vpop.f32.mrb[0].mxu0
      %1648 = vmatprep.mubr.f32.mxu0 %v1455
      %1649 = vmatmul.mubr.f32.gmra.mrb[0].mxu0 %v1454
      %v1650 = vpop.f32.mrb[0].mxu0
      %v1651 = vadd.f32 0.0, %v1650
      %v1652 = vpop.f32.mrb[0].mxu0
      %1653 = vmatprep.mubr.f32.mxu0 %v1457
      %1654 = vmatmul.mubr.f32.gmra.mrb[0].mxu0 %v1456
      %v1655 = vpop.f32.mrb[0].mxu0
      %v1656 = vadd.f32 0.0, %v1655
      %v1657 = vpop.f32.mrb[0].mxu0
      %1658 = vmatprep.mubr.f32.mxu0 %v1459
      %1659 = vmatmul.mubr.f32.gmra.mrb[0].mxu0 %v1458
      %v1660 = vpop.f32.mrb[0].mxu0
      %v1661 = vadd.f32 0.0, %v1660
      %v1662 = vpop.f32.mrb[0].mxu0
      %1663 = vmatprep.mubr.f32.mxu0 %v1461
      %1664 = vmatmul.mubr.f32.gmra.mrb[0].mxu0 %v1460
      %v1665 = vpop.f32.mrb[0].mxu0
      %v1666 = vadd.f32 0.0, %v1665
      %v1667 = vpop.f32.mrb[0].mxu0
      %1668 = vmatprep.mubr.f32.mxu0 %v1463
      %1669 = vmatmul.mubr.f32.gmra.mrb[0].mxu0 %v1462
      %v1670 = vpop.f32.mrb[0].mxu0
      %v1671 = vadd.f32 0.0, %v1670
      %v1672 = vpop.f32.mrb[0].mxu0
      %1673 = vmatprep.mubr.f32.mxu0 %v1465
      %1674 = vmatmul.mubr.f32.gmra.mrb[0].mxu0 %v1464
      %v1675 = vpop.f32.mrb[0].mxu0
      %v1676 = vadd.f32 0.0, %v1675
      %v1677 = vpop.f32.mrb[0].mxu0
      %1678 = vmatprep.mubr.f32.mxu0 %v1467
      %1679 = vmatmul.mubr.f32.gmra.mrb[0].mxu0 %v1466
      %v1680 = vpop.f32.mrb[0].mxu0
      %v1681 = vadd.f32 0.0, %v1680
      %v1682 = vpop.f32.mrb[0].mxu0
      %1683 = vmatprep.mubr.f32.mxu0 %v1469
      %1684 = vmatmul.mubr.f32.gmra.mrb[0].mxu0 %v1468
      %v1685 = vpop.f32.mrb[0].mxu0
      %v1686 = vadd.f32 0.0, %v1685
      %v1687 = vpop.f32.mrb[0].mxu0
      %1688 = vmatprep.mubr.f32.mxu0 %v1471
      %1689 = vmatmul.mubr.f32.gmra.mrb[0].mxu0 %v1470
      %v1690 = vpop.f32.mrb[0].mxu0
      %v1691 = vadd.f32 0.0, %v1690
      %v1692 = vpop.f32.mrb[0].mxu0
      %1693 = vmatprep.mubr.f32.mxu0 %v1473
      %1694 = vmatmul.mubr.f32.gmra.mrb[0].mxu0 %v1472
      %v1695 = vpop.f32.mrb[0].mxu0
      %v1696 = vadd.f32 0.0, %v1695
      %v1697 = vpop.f32.mrb[0].mxu0
      %1698 = vdwg.mxu0
      %v1699 = vadd.f32 %v1508, %v1055
      %v1700 = vadd.f32 %v1511, %v1055
      %v1701 = vadd.f32 %v1514, %v1055
      %v1702 = vadd.f32 %v1517, %v1055
      %v1703 = vadd.f32 %v1520, %v1055
      %v1704 = vadd.f32 %v1523, %v1055
      %v1705 = vadd.f32 %v1526, %v1055
      %v1706 = vadd.f32 %v1529, %v1055
      %v1707 = vadd.f32 %v1532, %v1055
      %v1708 = vadd.f32 %v1535, %v1055
      %v1709 = vadd.f32 %v1538, %v1055
      %v1710 = vadd.f32 %v1541, %v1055
      %v1711 = vadd.f32 %v1544, %v1055
      %v1712 = vadd.f32 %v1547, %v1055
      %v1713 = vadd.f32 %v1550, %v1055
      %v1714 = vadd.f32 %v1553, %v1055
      %v1715 = vmul.f32 %v1621, 2.0
      %v1716 = vmul.f32 %v1626, 2.0
      %v1717 = vmul.f32 %v1631, 2.0
      %v1718 = vmul.f32 %v1636, 2.0
      %v1719 = vmul.f32 %v1641, 2.0
      %v1720 = vmul.f32 %v1646, 2.0
      %v1721 = vmul.f32 %v1651, 2.0
      %v1722 = vmul.f32 %v1656, 2.0
      %v1723 = vmul.f32 %v1661, 2.0
      %v1724 = vmul.f32 %v1666, 2.0
      %v1725 = vmul.f32 %v1671, 2.0
      %v1726 = vmul.f32 %v1676, 2.0
      %v1727 = vmul.f32 %v1681, 2.0
      %v1728 = vmul.f32 %v1686, 2.0
      %v1729 = vmul.f32 %v1691, 2.0
      %v1730 = vmul.f32 %v1696, 2.0
      %v1731 = vsub.f32 %v1699, %v1715
      %v1732 = vsub.f32 %v1700, %v1716
      %v1733 = vsub.f32 %v1701, %v1717
      %v1734 = vsub.f32 %v1702, %v1718
      %v1735 = vsub.f32 %v1703, %v1719
      %v1736 = vsub.f32 %v1704, %v1720
      %v1737 = vsub.f32 %v1705, %v1721
      %v1738 = vsub.f32 %v1706, %v1722
      %v1739 = vsub.f32 %v1707, %v1723
      %v1740 = vsub.f32 %v1708, %v1724
      %v1741 = vsub.f32 %v1709, %v1725
      %v1742 = vsub.f32 %v1710, %v1726
      %v1743 = vsub.f32 %v1711, %v1727
      %v1744 = vsub.f32 %v1712, %v1728
      %v1745 = vsub.f32 %v1713, %v1729
      %v1746 = vsub.f32 %v1714, %v1730
      %v1747 = vmax.f32 %v1731, 0.0
      %v1748 = vmax.f32 %v1732, 0.0
      %v1749 = vmax.f32 %v1733, 0.0
      %v1750 = vmax.f32 %v1734, 0.0
      %v1751 = vmax.f32 %v1735, 0.0
      %v1752 = vmax.f32 %v1736, 0.0
      %v1753 = vmax.f32 %v1737, 0.0
      %v1754 = vmax.f32 %v1738, 0.0
      %v1755 = vmax.f32 %v1739, 0.0
      %v1756 = vmax.f32 %v1740, 0.0
      %v1757 = vmax.f32 %v1741, 0.0
      %v1758 = vmax.f32 %v1742, 0.0
      %v1759 = vmax.f32 %v1743, 0.0
      %v1760 = vmax.f32 %v1744, 0.0
      %v1761 = vmax.f32 %v1745, 0.0
      %v1762 = vmax.f32 %v1746, 0.0
      %v1763 = vrsqrt.pop %v1747
      %v1764 = vmul.f32 %v1747, %v1763
      %vm1765 = vcmp.eq.f32.partialorder %v1747, inf
      %v1766 = vsel %vm1765, %v1747, %v1764
      %vm1767 = vcmp.eq.f32.partialorder %v1747, 0.0
      %v1768 = vand.u32 %v1747, 2147483648
      %v1769 = vsel %vm1767, %v1768, %v1766
      %v1770 = vrsqrt.pop %v1748
      %v1771 = vmul.f32 %v1748, %v1770
      %vm1772 = vcmp.eq.f32.partialorder %v1748, inf
      %v1773 = vsel %vm1772, %v1748, %v1771
      %vm1774 = vcmp.eq.f32.partialorder %v1748, 0.0
      %v1775 = vand.u32 %v1748, 2147483648
      %v1776 = vsel %vm1774, %v1775, %v1773
      %v1777 = vrsqrt.pop %v1749
      %v1778 = vmul.f32 %v1749, %v1777
      %vm1779 = vcmp.eq.f32.partialorder %v1749, inf
      %v1780 = vsel %vm1779, %v1749, %v1778
      %vm1781 = vcmp.eq.f32.partialorder %v1749, 0.0
      %v1782 = vand.u32 %v1749, 2147483648
      %v1783 = vsel %vm1781, %v1782, %v1780
      %v1784 = vrsqrt.pop %v1750
      %v1785 = vmul.f32 %v1750, %v1784
      %vm1786 = vcmp.eq.f32.partialorder %v1750, inf
      %v1787 = vsel %vm1786, %v1750, %v1785
      %vm1788 = vcmp.eq.f32.partialorder %v1750, 0.0
      %v1789 = vand.u32 %v1750, 2147483648
      %v1790 = vsel %vm1788, %v1789, %v1787
      %v1791 = vrsqrt.pop %v1751
      %v1792 = vmul.f32 %v1751, %v1791
      %vm1793 = vcmp.eq.f32.partialorder %v1751, inf
      %v1794 = vsel %vm1793, %v1751, %v1792
      %vm1795 = vcmp.eq.f32.partialorder %v1751, 0.0
      %v1796 = vand.u32 %v1751, 2147483648
      %v1797 = vsel %vm1795, %v1796, %v1794
      %v1798 = vrsqrt.pop %v1752
      %v1799 = vmul.f32 %v1752, %v1798
      %vm1800 = vcmp.eq.f32.partialorder %v1752, inf
      %v1801 = vsel %vm1800, %v1752, %v1799
      %vm1802 = vcmp.eq.f32.partialorder %v1752, 0.0
      %v1803 = vand.u32 %v1752, 2147483648
      %v1804 = vsel %vm1802, %v1803, %v1801
      %v1805 = vrsqrt.pop %v1753
      %v1806 = vmul.f32 %v1753, %v1805
      %vm1807 = vcmp.eq.f32.partialorder %v1753, inf
      %v1808 = vsel %vm1807, %v1753, %v1806
      %vm1809 = vcmp.eq.f32.partialorder %v1753, 0.0
      %v1810 = vand.u32 %v1753, 2147483648
      %v1811 = vsel %vm1809, %v1810, %v1808
      %v1812 = vrsqrt.pop %v1754
      %v1813 = vmul.f32 %v1754, %v1812
      %vm1814 = vcmp.eq.f32.partialorder %v1754, inf
      %v1815 = vsel %vm1814, %v1754, %v1813
      %vm1816 = vcmp.eq.f32.partialorder %v1754, 0.0
      %v1817 = vand.u32 %v1754, 2147483648
      %v1818 = vsel %vm1816, %v1817, %v1815
      %v1819 = vrsqrt.pop %v1755
      %v1820 = vmul.f32 %v1755, %v1819
      %vm1821 = vcmp.eq.f32.partialorder %v1755, inf
      %v1822 = vsel %vm1821, %v1755, %v1820
      %vm1823 = vcmp.eq.f32.partialorder %v1755, 0.0
      %v1824 = vand.u32 %v1755, 2147483648
      %v1825 = vsel %vm1823, %v1824, %v1822
      %v1826 = vrsqrt.pop %v1756
      %v1827 = vmul.f32 %v1756, %v1826
      %vm1828 = vcmp.eq.f32.partialorder %v1756, inf
      %v1829 = vsel %vm1828, %v1756, %v1827
      %vm1830 = vcmp.eq.f32.partialorder %v1756, 0.0
      %v1831 = vand.u32 %v1756, 2147483648
      %v1832 = vsel %vm1830, %v1831, %v1829
      %v1833 = vrsqrt.pop %v1757
      %v1834 = vmul.f32 %v1757, %v1833
      %vm1835 = vcmp.eq.f32.partialorder %v1757, inf
      %v1836 = vsel %vm1835, %v1757, %v1834
      %vm1837 = vcmp.eq.f32.partialorder %v1757, 0.0
      %v1838 = vand.u32 %v1757, 2147483648
      %v1839 = vsel %vm1837, %v1838, %v1836
      %v1840 = vrsqrt.pop %v1758
      %v1841 = vmul.f32 %v1758, %v1840
      %vm1842 = vcmp.eq.f32.partialorder %v1758, inf
      %v1843 = vsel %vm1842, %v1758, %v1841
      %vm1844 = vcmp.eq.f32.partialorder %v1758, 0.0
      %v1845 = vand.u32 %v1758, 2147483648
      %v1846 = vsel %vm1844, %v1845, %v1843
      %v1847 = vrsqrt.pop %v1759
      %v1848 = vmul.f32 %v1759, %v1847
      %vm1849 = vcmp.eq.f32.partialorder %v1759, inf
      %v1850 = vsel %vm1849, %v1759, %v1848
      %vm1851 = vcmp.eq.f32.partialorder %v1759, 0.0
      %v1852 = vand.u32 %v1759, 2147483648
      %v1853 = vsel %vm1851, %v1852, %v1850
      %v1854 = vrsqrt.pop %v1760
      %v1855 = vmul.f32 %v1760, %v1854
      %vm1856 = vcmp.eq.f32.partialorder %v1760, inf
      %v1857 = vsel %vm1856, %v1760, %v1855
      %vm1858 = vcmp.eq.f32.partialorder %v1760, 0.0
      %v1859 = vand.u32 %v1760, 2147483648
      %v1860 = vsel %vm1858, %v1859, %v1857
      %v1861 = vrsqrt.pop %v1761
      %v1862 = vmul.f32 %v1761, %v1861
      %vm1863 = vcmp.eq.f32.partialorder %v1761, inf
      %v1864 = vsel %vm1863, %v1761, %v1862
      %vm1865 = vcmp.eq.f32.partialorder %v1761, 0.0
      %v1866 = vand.u32 %v1761, 2147483648
      %v1867 = vsel %vm1865, %v1866, %v1864
      %v1868 = vrsqrt.pop %v1762
      %v1869 = vmul.f32 %v1762, %v1868
      %vm1870 = vcmp.eq.f32.partialorder %v1762, inf
      %v1871 = vsel %vm1870, %v1762, %v1869
      %vm1872 = vcmp.eq.f32.partialorder %v1762, 0.0
      %v1873 = vand.u32 %v1762, 2147483648
      %v1874 = vsel %vm1872, %v1873, %v1871
      %1875 = vst [vmem:[%s202] sm:$0xff] %v1769
      %1876 = vst [vmem:[%s202 + $0x8] sm:$0xff] %v1776
      %1877 = vst [vmem:[%s202 + $0x10] sm:$0xff] %v1783
      %1878 = vst [vmem:[%s202 + $0x18] sm:$0xff] %v1790
      %1879 = vst [vmem:[%s202 + $0x20] sm:$0xff] %v1797
      %1880 = vst [vmem:[%s202 + $0x28] sm:$0xff] %v1804
      %1881 = vst [vmem:[%s202 + $0x30] sm:$0xff] %v1811
      %1882 = vst [vmem:[%s202 + $0x38] sm:$0xff] %v1818
      %1883 = vst [vmem:[%s202 + $0x40] sm:$0xff] %v1825
      %1884 = vst [vmem:[%s202 + $0x48] sm:$0xff] %v1832
      %1885 = vst [vmem:[%s202 + $0x50] sm:$0xff] %v1839
      %1886 = vst [vmem:[%s202 + $0x58] sm:$0xff] %v1846
      %1887 = vst [vmem:[%s202 + $0x60] sm:$0xff] %v1853
      %1888 = vst [vmem:[%s202 + $0x68] sm:$0xff] %v1860
      %1889 = vst [vmem:[%s202 + $0x70] sm:$0xff] %v1867
      %1890 = vst [vmem:[%s202 + $0x78] sm:$0xff] %v1874
      %s1891 = smul.u32 16, %s15
      %p1892 = scmp.lt.s32.totalorder %s1891, 47
      %s1893 = scalar_select %p1892, %s1891, 47
      %s1894 = smul.addr %s1893, 8
      %s1895 = scalar_lea.vmem %s4, %s1894
      // Predicated region
      $region37: #{_lambda_.1} parent=35 // pred_check
        %p1896 = pneg %p122
      $region38: #{_lambda_.1} parent=35 // pred_check_branch
        %1898 = sbr.rel (%p1896) target = $region40
      $region39: #{_lambda_.1} parent=35 // pred_region
        %s1899 = smul.u32 16, %s15
      $region40: #{_lambda_.1} parent=35 // pred_fallthru
        _
    $region36: #{_lambda_.1} parent=5 // pred_fallthru
      _
    %p1900 = scmp.le.s32.totalorder 2, %s10
    // Predicated region
    $region41: #{_lambda_.1} parent=5 // pred_check
      %p1901 = pneg %p1900
    $region42: #{_lambda_.1} parent=5 // pred_check_branch
      %1903 = sbr.rel (%p1901) target = $region44
    $region43: #{_lambda_.1} parent=5 // pred_region
      %s1904 = ssub.s32 %s10, 2
      // Predicated region
      $region45: #{_lambda_.1} parent=43 // pred_check
        %p1905 = pneg %p128
      $region46: #{_lambda_.1} parent=43 // pred_check_branch
        %1907 = sbr.rel (%p1905) target = $region48
      $region47: #{_lambda_.1} parent=43 // pred_region
        %s1908 = smul.u32 16, %s16
        %p1909 = scmp.lt.s32.totalorder %s1908, 47
        %s1910 = scalar_select %p1909, %s1908, 47
        %s1911 = smul.addr %s1910, 8
        %s1912 = scalar_lea.vmem %s4, %s1911
      $region48: #{_lambda_.1} parent=43 // pred_fallthru
        _
    $region44: #{_lambda_.1} parent=5 // pred_fallthru
      _
  $region6: #{_lambda_.1} parent=0 // loop_footer
    %s14 = sadd.s32 1, %s10
  $region7: #{_lambda_.1} parent=0 // loop_footer_branch
    %9 = sbr.rel target = $region3
  $region8: #{_lambda_.1} parent=0 // loop_exit
    _

</llo_original>
